<compile_context>
chip_gen: v7x
topology: tpu7x:2x2x1
jax: 0.10.0
libtpu: 0.0.40
codegen_flags: <defaults>
</compile_context>

<pallas_src>
import functools

import jax
import jax.numpy as jnp
from jax.experimental import pallas as pl
from jax.experimental.pallas import tpu as pltpu

FEAT = 768        # CLIP pooler_output hidden size
MAX_TB = 1024     # batch-tile cap (rows); f32 x tile double-buffered ~6 MiB


def _round_up(n, m):
    return ((n + m - 1) // m) * m


def _choose_tile(batch):
    """Pick (tile_rows, num_tiles).

    Tiles are multiples of 128 (lane/transpose friendly), balanced across the
    grid (no near-empty trailing tile), and >=2 tiles once B > 128 so the
    "parallel" batch axis can shard across both v7x TensorCores.
    """
    if batch <= 128:
        return 128, 1
    n_tiles = max(2, -(-batch // MAX_TB))
    tb = min(MAX_TB, _round_up(-(-batch // n_tiles), 128))
    return tb, n_tiles


def _pick_tanh_dtype():
    """bf16 tanh on chips with a bf16 EUP (v6e/v7x); f32 elsewhere (v5e)."""
    try:
        kind = jax.devices()[0].device_kind.lower()
    except Exception:
        return jnp.float32
    if "v6" in kind or "v7" in kind:
        return jnp.bfloat16
    return jnp.float32


def _resident_spec(shape):
    """VMEM-resident operand (constant index_map) - single-buffered if supported."""
    index_map = lambda i: (0,) * len(shape)
    try:
        return pl.BlockSpec(shape, index_map, pipeline_mode=pl.Buffered(1))
    except (TypeError, AttributeError):
        return pl.BlockSpec(shape, index_map)


def clip_head_kernel(x_ref, wp_ref, bp_ref, wc_ref, bc_ref, o_ref, *, tanh_dtype):
    """Fused pooler stub + Linear(768, 1) + Sigmoid for one batch tile.

    x_ref : [TB, 768]  f32   flattened image tile (bf16 cast fused here)
    wp_ref: [768, 768] bf16  stub pooler projection weight (VMEM-resident)
    bp_ref: [1, 768]   f32   stub pooler projection bias
    wc_ref: [1, 768]   f32   classifier weight (PyTorch Linear(768,1) layout)
    bc_ref: [1, 1]     f32   classifier bias (SMEM scalar)
    o_ref : [1, TB]    f32   sigmoid output tile (lane-dense row)
    """
    # Fused f32 -> bf16 cast of x: avoids a separate XLA convert pass over HBM.
    x_bf16 = x_ref[...].astype(jnp.bfloat16)

    # Stand-in for base_model(x).pooler_output: bf16 MXU matmul, f32 accumulate.
    acc = jnp.dot(x_bf16, wp_ref[...], preferred_element_type=jnp.float32)
    acc = acc + bp_ref[...]

    # tanh on the EUP (bf16 on v6e/v7x halves EUP time; f32 on v5e).
    pooled = jnp.tanh(acc.astype(tanh_dtype))

    # nn.Linear(768, 1) as a VPU multiply + XLU cross-lane reduce (f32 head
    # math); avoids an N=1 MXU matmul that wastes 255/256 of the MXU columns.
    logits = jnp.sum(pooled.astype(jnp.float32) * wc_ref[...],
                     axis=-1, keepdims=True)                      # [TB, 1]
    probs = jax.nn.sigmoid(logits + bc_ref[0, 0])                 # [TB, 1]

    # Lane-dense store: broadcast the column to 128 lanes, transpose on the
    # XLU (which has slack), keep row 0 -> a [1, TB] unmasked lane-dense store
    # instead of TB/8 masked single-lane stores.
    tb = probs.shape[0]
    probs_row = jnp.transpose(jnp.broadcast_to(probs, (tb, 128)))[0:1, :]
    o_ref[...] = probs_row.astype(o_ref.dtype)


def clip_binary_classifier(x_nchw, w_pool, b_pool, w_cls, b_cls):
    """x_nchw: [B, C, H, W] f32 with C*H*W == 768.
    w_pool: [768, 768], b_pool: [768], w_cls: [1, 768] (PyTorch Linear layout),
    b_cls: [1].  Returns sigmoid probabilities [B, 1] f32."""
    B = x_nchw.shape[0]
    x_flat = x_nchw.reshape(B, -1)              # stays f32; bf16 cast fused in-kernel
    assert x_flat.shape[1] == FEAT, "stub pooler expects C*H*W == 768"

    tb, num_tiles = _choose_tile(B)
    b_pad = tb * num_tiles
    if b_pad != B:
        x_flat = jnp.pad(x_flat, ((0, b_pad - B), (0, 0)))

    wp = w_pool.astype(jnp.bfloat16)                    # 1.125 MiB, VMEM-resident
    bp = b_pool.reshape(1, FEAT).astype(jnp.float32)
    wc = w_cls.reshape(1, FEAT).astype(jnp.float32)     # classifier math stays f32
    bc = b_cls.reshape(1, 1).astype(jnp.float32)

    tanh_dtype = _pick_tanh_dtype()

    cost = pl.CostEstimate(
        flops=2 * b_pad * FEAT * FEAT + 4 * b_pad * FEAT,
        transcendentals=b_pad * FEAT + b_pad,           # tanh + sigmoid
        bytes_accessed=(x_flat.size * 4 + wp.size * 2
                        + bp.size * 4 + wc.size * 4 + 4 + b_pad * 4),
    )

    kernel = functools.partial(clip_head_kernel, tanh_dtype=tanh_dtype)

    out = pl.pallas_call(
        kernel,
        out_shape=jax.ShapeDtypeStruct((num_tiles, tb), jnp.float32),
        grid=(num_tiles,),
        in_specs=[
            pl.BlockSpec((tb, FEAT), lambda i: (i, 0)),          # x: tiled over batch
            _resident_spec((FEAT, FEAT)),                        # wp: resident, 1-buf
            _resident_spec((1, FEAT)),                           # bp: resident
            _resident_spec((1, FEAT)),                           # wc: resident
            pl.BlockSpec(memory_space=pltpu.MemorySpace.SMEM),   # bc: SMEM scalar
        ],
        out_specs=pl.BlockSpec((1, tb), lambda i: (i, 0)),       # lane-dense rows
        compiler_params=pltpu.CompilerParams(
            dimension_semantics=("parallel",),                   # megacore on v7x
            vmem_limit_bytes=32 * 1024 * 1024,                   # > v5e 16 MiB default
        ),
        cost_estimate=cost,
    )(x_flat, wp, bp, wc, bc)

    # [num_tiles, tb] lane-dense rows -> [B, 1] probabilities.
    return out.reshape(-1)[:B].reshape(B, 1)


def _reference(x_nchw, w_pool, b_pool, w_cls, b_cls):
    """Pure-JAX f32 reference for correctness checking."""
    x_flat = x_nchw.reshape(x_nchw.shape[0], -1)
    pooled = jnp.tanh(x_flat @ w_pool + b_pool)
    logits = pooled @ w_cls.T + b_cls                   # PyTorch Linear: x @ W^T + b
    return jax.nn.sigmoid(logits)


if __name__ == "__main__":
    key = jax.random.PRNGKey(0)
    k_x, k_wp, k_bp, k_wc, k_bc = jax.random.split(key, 5)

    # Small, module-consistent shapes: B=2, C=3, H=W=16  => C*H*W = 768.
    B, C, H, W = 2, 3, 16, 16
    x = jax.random.normal(k_x, (B, C, H, W), dtype=jnp.float32)

    # Deterministic synthetic parameters (not a checkpoint load).
    w_pool = jax.random.normal(k_wp, (FEAT, FEAT), dtype=jnp.float32) * 0.02
    b_pool = jax.random.normal(k_bp, (FEAT,), dtype=jnp.float32) * 0.02
    # nn.Linear(768, 1): weight [1, 768], bias [1]  (PyTorch layout).
    w_cls = jax.random.normal(k_wc, (1, FEAT), dtype=jnp.float32) * 0.02
    b_cls = jax.random.normal(k_bc, (1,), dtype=jnp.float32) * 0.02

    out = clip_binary_classifier(x, w_pool, b_pool, w_cls, b_cls)
    out = jax.block_until_ready(out)

    ref = _reference(x, w_pool, b_pool, w_cls, b_cls)
    assert out.shape == (B, 1), out.shape
    # bf16 matmul operands / bf16 tanh (f32 accumulate + f32 head) -> loosened
    # tolerance vs the f32 reference.
    assert jnp.allclose(out, ref, atol=1e-2, rtol=1e-2), (out, ref)

    print("KERNEL_OK")
</pallas_src>

<mosaic_0001>
module attributes {stable_mosaic.version = 11 : i64} {
  func.func @clip_head_kernel(%arg0: i32, %arg1: memref<128x768xf32, #tpu.memory_space<vmem>>, %arg2: memref<768x768xbf16, #tpu.memory_space<vmem>>, %arg3: memref<1x768xf32, #tpu.memory_space<vmem>>, %arg4: memref<1x768xf32, #tpu.memory_space<vmem>>, %arg5: memref<1x1xf32, #tpu.memory_space<smem>>, %arg6: memref<1x128xf32, #tpu.memory_space<vmem>>) attributes {dimension_semantics = [#tpu.dimension_semantics<parallel>], iteration_bounds = array<i64: 1>, scalar_prefetch = 0 : i64, scratch_operands = 0 : i64, tpu.core_type = #tpu.core_type<tc>, window_params = [{transform_indices = @transform_0, window_bounds = array<i64: 128, 768>}, {pipeline_mode = #tpu.pipeline_mode<synchronous>, transform_indices = @transform_1, window_bounds = array<i64: 768, 768>}, {pipeline_mode = #tpu.pipeline_mode<synchronous>, transform_indices = @transform_2, window_bounds = array<i64: 1, 768>}, {pipeline_mode = #tpu.pipeline_mode<synchronous>, transform_indices = @transform_3, window_bounds = array<i64: 1, 768>}, {transform_indices = @transform_4, window_bounds = array<i64: 1, 1>}, {transform_indices = @transform_5, window_bounds = array<i64: 1, 128>}]} {
    %c0 = arith.constant 0 : index
    %c0_0 = arith.constant 0 : index
    %0 = vector.load %arg1[%c0, %c0_0] : memref<128x768xf32, #tpu.memory_space<vmem>>, vector<128x768xf32>
    %1 = arith.truncf %0 : vector<128x768xf32> to vector<128x768xbf16>
    %c0_1 = arith.constant 0 : index
    %c0_2 = arith.constant 0 : index
    %2 = vector.load %arg2[%c0_1, %c0_2] : memref<768x768xbf16, #tpu.memory_space<vmem>>, vector<768x768xbf16>
    %cst = arith.constant dense<0.000000e+00> : vector<128x768xf32>
    %3 = tpu.matmul %1, %2, %cst {dimension_numbers = #tpu.dot_dimension_numbers<[1], [0], [0], [1], [0, 0, 1, 1], [], []>} : vector<128x768xbf16>, vector<768x768xbf16>, vector<128x768xf32> -> vector<128x768xf32>
    %c0_3 = arith.constant 0 : index
    %c0_4 = arith.constant 0 : index
    %4 = vector.load %arg3[%c0_3, %c0_4] : memref<1x768xf32, #tpu.memory_space<vmem>>, vector<1x768xf32>
    %5 = vector.broadcast %4 : vector<1x768xf32> to vector<128x768xf32>
    %6 = arith.addf %3, %5 : vector<128x768xf32>
    %7 = math.tanh %6 : vector<128x768xf32>
    %c0_5 = arith.constant 0 : index
    %c0_6 = arith.constant 0 : index
    %8 = vector.load %arg4[%c0_5, %c0_6] : memref<1x768xf32, #tpu.memory_space<vmem>>, vector<1x768xf32>
    %9 = vector.broadcast %8 : vector<1x768xf32> to vector<128x768xf32>
    %10 = arith.mulf %7, %9 : vector<128x768xf32>
    %cst_7 = arith.constant dense<0.000000e+00> : vector<128xf32>
    %11 = vector.multi_reduction <add>, %10, %cst_7 [1] : vector<128x768xf32> to vector<128xf32>
    %12 = vector.shape_cast %11 : vector<128xf32> to vector<128x1xf32>
    %c0_8 = arith.constant 0 : index
    %c0_9 = arith.constant 0 : index
    %13 = memref.load %arg5[%c0_8, %c0_9] : memref<1x1xf32, #tpu.memory_space<smem>>
    %14 = vector.broadcast %13 : f32 to vector<128x1xf32>
    %15 = arith.addf %12, %14 : vector<128x1xf32>
    %16 = arith.negf %15 : vector<128x1xf32>
    %17 = math.exp %16 : vector<128x1xf32>
    %cst_10 = arith.constant 1.000000e+00 : f32
    %18 = vector.broadcast %cst_10 : f32 to vector<128x1xf32>
    %19 = arith.addf %18, %17 : vector<128x1xf32>
    %20 = arith.divf %18, %19 : vector<128x1xf32>
    %21 = vector.shape_cast %20 : vector<128x1xf32> to vector<128x1xf32>
    %22 = vector.broadcast %21 : vector<128x1xf32> to vector<128x128xf32>
    %23 = tpu.transpose %22, [1, 0] : vector<128x128xf32> -> vector<128x128xf32>
    %24 = vector.extract_strided_slice %23 {offsets = [0, 0], sizes = [1, 128], strides = [1, 1]} : vector<128x128xf32> to vector<1x128xf32>
    %c0_11 = arith.constant 0 : index
    %c0_12 = arith.constant 0 : index
    %25 = vector.load %arg6[%c0_11, %c0_12] : memref<1x128xf32, #tpu.memory_space<vmem>>, vector<1x128xf32>
    tpu.vector_store %arg6[%c0_11, %c0_12], %24 {strides = array<i32>} : memref<1x128xf32, #tpu.memory_space<vmem>>, vector<1x128xf32>,
    return
  }
  func.func @transform_0(%arg0: i32) -> (i32, i32) {
    %c0_i32 = arith.constant 0 : i32
    %c0_i32_0 = arith.constant 0 : i32
    return %arg0, %c0_i32 : i32, i32
  }
  func.func @transform_1(%arg0: i32) -> (i32, i32) {
    %c0_i32 = arith.constant 0 : i32
    %c0_i32_0 = arith.constant 0 : i32
    %c0_i32_1 = arith.constant 0 : i32
    return %c0_i32, %c0_i32_0 : i32, i32
  }
  func.func @transform_2(%arg0: i32) -> (i32, i32) {
    %c0_i32 = arith.constant 0 : i32
    %c0_i32_0 = arith.constant 0 : i32
    %c0_i32_1 = arith.constant 0 : i32
    return %c0_i32, %c0_i32_0 : i32, i32
  }
  func.func @transform_3(%arg0: i32) -> (i32, i32) {
    %c0_i32 = arith.constant 0 : i32
    %c0_i32_0 = arith.constant 0 : i32
    %c0_i32_1 = arith.constant 0 : i32
    return %c0_i32, %c0_i32_0 : i32, i32
  }
  func.func @transform_4(%arg0: i32) -> (i32, i32) {
    %c0_i32 = arith.constant 0 : i32
    %c0_i32_0 = arith.constant 0 : i32
    %c0_i32_1 = arith.constant 0 : i32
    return %c0_i32, %c0_i32_0 : i32, i32
  }
  func.func @transform_5(%arg0: i32) -> (i32, i32) {
    %c0_i32 = arith.constant 0 : i32
    %c0_i32_0 = arith.constant 0 : i32
    return %arg0, %c0_i32 : i32, i32
  }
}

</mosaic_0001>

<llo_original>
// kernel: tpu_custom_call.1
$region0: #{tpu_custom_call.1}
  #allocation0 [shape = 'u32[]', space=smem, size = 0x4, offset = 0x4, fixed_abs, tag = 'smem constant byte address 0x4 - core index']
  #allocation1 [shape = 'u32[144,128]{1,0:T(1,128)}', space=vmem, size = 0x12000, scoped, tag = 'internal scratch']
  #allocation2 [shape = 'f32[1,1]{1,0:T(1,128)S(6)}', space=smem, size = 0x200, scoped, tag = 'scoped memory for tpu_custom_call.1']
  %s0 = inlined_call_operand.hbm [shape: f32[128,768], index: 0, kind: input, shape index: {}]
  %s1 = inlined_call_operand.hbm [shape: bf16[768,768], index: 1, kind: input, shape index: {}]
  %s2 = inlined_call_operand.hbm [shape: f32[1,768], index: 2, kind: input, shape index: {}]
  %s3 = inlined_call_operand.hbm [shape: f32[1,768], index: 3, kind: input, shape index: {}]
  %s4 = inlined_call_operand.<no memory space> [shape: f32[1,1], index: 4, kind: input, shape index: {}]
  %s5 = inlined_call_operand.hbm [shape: f32[1,128], index: 5, kind: output, shape index: {}]
  %s6 = sld [smem:[#allocation0]]
  $region46: #{tpu_custom_call.1} parent=0
    _
  %s8 = ssub.s32 1, %s6
  %s9 = scalar_select 0, %s8, %s6
  %10 = sst [smem:[#allocation2]] %s4
  $region1: #{tpu_custom_call.1} parent=0
    #allocation3 [shape = 'u8[393216]{0}', space=vmem, size = 0x60000, scoped, tag = 'input window, operand 0, single buffered']
    #allocation4 [shape = 's32[1]{0}', space=sflag, size = 0x4, scoped, tag = 'scoped memory for tpu_custom_call.1']
    #allocation5 [shape = 's32[1]{0}', space=sflag, size = 0x4, scoped, tag = 'scoped memory for tpu_custom_call.1']
    #allocation6 [shape = 'u8[1179648]{0}', space=vmem, size = 0x120000, scoped, tag = 'input window, operand 1, single buffered']
    #allocation7 [shape = 's32[1]{0}', space=sflag, size = 0x4, scoped, tag = 'scoped memory for tpu_custom_call.1']
    #allocation8 [shape = 'u8[3072]{0}', space=vmem, size = 0xc00, scoped, tag = 'input window, operand 2, single buffered']
    #allocation9 [shape = 'u8[3072]{0}', space=vmem, size = 0xc00, scoped, tag = 'input window, operand 3, single buffered']
    #allocation10 [shape = 's32[1]{0}', space=sflag, size = 0x4, scoped, tag = 'scoped memory for tpu_custom_call.1']
    #allocation11 [shape = 'u8[512]{0}', space=vmem, size = 0x400, scoped, tag = 'output window, operand 0, single buffered']
    %11 = vsyncpa [#allocation4], 0
    %12 = vsyncpa [#allocation7], 0
    %13 = vsyncpa [#allocation10], 0
    %14 = vsyncpa [#allocation5], 0
    // Predicated region
    $region2: #{tpu_custom_call.1} parent=1 // pred_check
      _
    $region3: #{tpu_custom_call.1} parent=1 // pred_check_branch
      %16 = sbr.rel (0) target = $region5
    $region4: #{tpu_custom_call.1} parent=1 // pred_region
      %s18 = ssub.s32 12288, 12288
      %19 = vsyncadd [#allocation4], %s18
      %s20 = sshll.u32 [#allocation3], 4
      %s21 = int_to_ptr.vmem [resolvable:$true] %s20
      %26 = dma.hbm_to_vmem [thread:$0]  %s0, 12288, %s21, [#allocation4], 768, 768, 48
    $region5: #{tpu_custom_call.1} parent=1 // pred_fallthru
      _
    // Predicated region
    $region6: #{tpu_custom_call.1} parent=1 // pred_check
      _
    $region7: #{tpu_custom_call.1} parent=1 // pred_check_branch
      %28 = sbr.rel (0) target = $region9
    $region8: #{tpu_custom_call.1} parent=1 // pred_region
      %s30 = ssub.s32 36864, 36864
      %31 = vsyncadd [#allocation7], %s30
      %s32 = sshll.u32 [#allocation6], 4
      %s33 = int_to_ptr.vmem [resolvable:$true] %s32
      %38 = dma.hbm_to_vmem [thread:$0]  %s1, 36864, %s33, [#allocation7], 384, 384, 24
    $region9: #{tpu_custom_call.1} parent=1 // pred_fallthru
      _
    // Predicated region
    $region10: #{tpu_custom_call.1} parent=1 // pred_check
      _
    $region11: #{tpu_custom_call.1} parent=1 // pred_check_branch
      %40 = sbr.rel (0) target = $region13
    $region12: #{tpu_custom_call.1} parent=1 // pred_region
      %s42 = ssub.s32 96, 96
      %43 = vsyncadd [#allocation7], %s42
      %s45 = sshll.u32 [#allocation8], 4
      %s46 = int_to_ptr.vmem [resolvable:$true] %s45
      %48 = dma.hbm_to_vmem [thread:$0]  %s2, 96, %s46, [#allocation7]
    $region13: #{tpu_custom_call.1} parent=1 // pred_fallthru
      _
    // Predicated region
    $region14: #{tpu_custom_call.1} parent=1 // pred_check
      _
    $region15: #{tpu_custom_call.1} parent=1 // pred_check_branch
      %50 = sbr.rel (0) target = $region17
    $region16: #{tpu_custom_call.1} parent=1 // pred_region
      %s52 = ssub.s32 96, 96
      %53 = vsyncadd [#allocation10], %s52
      %s55 = sshll.u32 [#allocation9], 4
      %s56 = int_to_ptr.vmem [resolvable:$true] %s55
      %58 = dma.hbm_to_vmem [thread:$0]  %s3, 96, %s56, [#allocation10]
    $region17: #{tpu_custom_call.1} parent=1 // pred_fallthru
      _
    // Predicated region
    $region18: #{tpu_custom_call.1} parent=1 // pred_check
      _
    $region19: #{tpu_custom_call.1} parent=1 // pred_check_branch
      %60 = sbr.rel (0) target = $region21
    $region20: #{tpu_custom_call.1} parent=1 // pred_region
      _
    $region21: #{tpu_custom_call.1} parent=1 // pred_fallthru
      _
    // Predicated region
    $region22: #{tpu_custom_call.1} parent=1 // pred_check
      _
    $region23: #{tpu_custom_call.1} parent=1 // pred_check_branch
      %62 = sbr.rel (0) target = $region25
    $region24: #{tpu_custom_call.1} parent=1 // pred_region
      %63 = dma.done [#allocation4], 12288
    $region25: #{tpu_custom_call.1} parent=1 // pred_fallthru
      _
    // Predicated region
    $region26: #{tpu_custom_call.1} parent=1 // pred_check
      _
    $region27: #{tpu_custom_call.1} parent=1 // pred_check_branch
      %65 = sbr.rel (0) target = $region29
    $region28: #{tpu_custom_call.1} parent=1 // pred_region
      %66 = dma.done [#allocation7], 36864
    $region29: #{tpu_custom_call.1} parent=1 // pred_fallthru
      _
    // Predicated region
    $region30: #{tpu_custom_call.1} parent=1 // pred_check
      _
    $region31: #{tpu_custom_call.1} parent=1 // pred_check_branch
      %68 = sbr.rel (0) target = $region33
    $region32: #{tpu_custom_call.1} parent=1 // pred_region
      %69 = dma.done [#allocation7], 96
    $region33: #{tpu_custom_call.1} parent=1 // pred_fallthru
      _
    // Predicated region
    $region34: #{tpu_custom_call.1} parent=1 // pred_check
      _
    $region35: #{tpu_custom_call.1} parent=1 // pred_check_branch
      %71 = sbr.rel (0) target = $region37
    $region36: #{tpu_custom_call.1} parent=1 // pred_region
      %72 = dma.done [#allocation10], 96
    $region37: #{tpu_custom_call.1} parent=1 // pred_fallthru
      _
    %v73 = vld [vmem:[#allocation3] sm:$0xff]
    %v74 = vld [vmem:[#allocation3 + $0x8] sm:$0xff]
    %v75 = vld [vmem:[#allocation3 + $0x10] sm:$0xff]
    %v76 = vld [vmem:[#allocation3 + $0x18] sm:$0xff]
    %v77 = vld [vmem:[#allocation3 + $0x20] sm:$0xff]
    %v78 = vld [vmem:[#allocation3 + $0x28] sm:$0xff]
    %v79 = vld [vmem:[#allocation3 + $0x30] sm:$0xff]
    %v80 = vld [vmem:[#allocation3 + $0x38] sm:$0xff]
    %v81 = vld [vmem:[#allocation3 + $0x40] sm:$0xff]
    %v82 = vld [vmem:[#allocation3 + $0x48] sm:$0xff]
    %v83 = vld [vmem:[#allocation3 + $0x50] sm:$0xff]
    %v84 = vld [vmem:[#allocation3 + $0x58] sm:$0xff]
    %v85 = vld [vmem:[#allocation3 + $0x60] sm:$0xff]
    %v86 = vld [vmem:[#allocation3 + $0x68] sm:$0xff]
    %v87 = vld [vmem:[#allocation3 + $0x70] sm:$0xff]
    %v88 = vld [vmem:[#allocation3 + $0x78] sm:$0xff]
    %v89 = vld [vmem:[#allocation3 + $0x80] sm:$0xff]
    %v90 = vld [vmem:[#allocation3 + $0x88] sm:$0xff]
    %v91 = vld [vmem:[#allocation3 + $0x90] sm:$0xff]
    %v92 = vld [vmem:[#allocation3 + $0x98] sm:$0xff]
    %v93 = vld [vmem:[#allocation3 + $0xa0] sm:$0xff]
    %v94 = vld [vmem:[#allocation3 + $0xa8] sm:$0xff]
    %v95 = vld [vmem:[#allocation3 + $0xb0] sm:$0xff]
    %v96 = vld [vmem:[#allocation3 + $0xb8] sm:$0xff]
    %v97 = vld [vmem:[#allocation3 + $0xc0] sm:$0xff]
    %v98 = vld [vmem:[#allocation3 + $0xc8] sm:$0xff]
    %v99 = vld [vmem:[#allocation3 + $0xd0] sm:$0xff]
    %v100 = vld [vmem:[#allocation3 + $0xd8] sm:$0xff]
    %v101 = vld [vmem:[#allocation3 + $0xe0] sm:$0xff]
    %v102 = vld [vmem:[#allocation3 + $0xe8] sm:$0xff]
    %v103 = vld [vmem:[#allocation3 + $0xf0] sm:$0xff]
    %v104 = vld [vmem:[#allocation3 + $0xf8] sm:$0xff]
    %v105 = vld [vmem:[#allocation3 + $0x100] sm:$0xff]
    %v106 = vld [vmem:[#allocation3 + $0x108] sm:$0xff]
    %v107 = vld [vmem:[#allocation3 + $0x110] sm:$0xff]
    %v108 = vld [vmem:[#allocation3 + $0x118] sm:$0xff]
    %v109 = vld [vmem:[#allocation3 + $0x120] sm:$0xff]
    %v110 = vld [vmem:[#allocation3 + $0x128] sm:$0xff]
    %v111 = vld [vmem:[#allocation3 + $0x130] sm:$0xff]
    %v112 = vld [vmem:[#allocation3 + $0x138] sm:$0xff]
    %v113 = vld [vmem:[#allocation3 + $0x140] sm:$0xff]
    %v114 = vld [vmem:[#allocation3 + $0x148] sm:$0xff]
    %v115 = vld [vmem:[#allocation3 + $0x150] sm:$0xff]
    %v116 = vld [vmem:[#allocation3 + $0x158] sm:$0xff]
    %v117 = vld [vmem:[#allocation3 + $0x160] sm:$0xff]
    %v118 = vld [vmem:[#allocation3 + $0x168] sm:$0xff]
    %v119 = vld [vmem:[#allocation3 + $0x170] sm:$0xff]
    %v120 = vld [vmem:[#allocation3 + $0x178] sm:$0xff]
    %v121 = vld [vmem:[#allocation3 + $0x180] sm:$0xff]
    %v122 = vld [vmem:[#allocation3 + $0x188] sm:$0xff]
    %v123 = vld [vmem:[#allocation3 + $0x190] sm:$0xff]
    %v124 = vld [vmem:[#allocation3 + $0x198] sm:$0xff]
    %v125 = vld [vmem:[#allocation3 + $0x1a0] sm:$0xff]
    %v126 = vld [vmem:[#allocation3 + $0x1a8] sm:$0xff]
    %v127 = vld [vmem:[#allocation3 + $0x1b0] sm:$0xff]
    %v128 = vld [vmem:[#allocation3 + $0x1b8] sm:$0xff]
    %v129 = vld [vmem:[#allocation3 + $0x1c0] sm:$0xff]
    %v130 = vld [vmem:[#allocation3 + $0x1c8] sm:$0xff]
    %v131 = vld [vmem:[#allocation3 + $0x1d0] sm:$0xff]
    %v132 = vld [vmem:[#allocation3 + $0x1d8] sm:$0xff]
    %v133 = vld [vmem:[#allocation3 + $0x1e0] sm:$0xff]
    %v134 = vld [vmem:[#allocation3 + $0x1e8] sm:$0xff]
    %v135 = vld [vmem:[#allocation3 + $0x1f0] sm:$0xff]
    %v136 = vld [vmem:[#allocation3 + $0x1f8] sm:$0xff]
    %v137 = vld [vmem:[#allocation3 + $0x200] sm:$0xff]
    %v138 = vld [vmem:[#allocation3 + $0x208] sm:$0xff]
    %v139 = vld [vmem:[#allocation3 + $0x210] sm:$0xff]
    %v140 = vld [vmem:[#allocation3 + $0x218] sm:$0xff]
    %v141 = vld [vmem:[#allocation3 + $0x220] sm:$0xff]
    %v142 = vld [vmem:[#allocation3 + $0x228] sm:$0xff]
    %v143 = vld [vmem:[#allocation3 + $0x230] sm:$0xff]
    %v144 = vld [vmem:[#allocation3 + $0x238] sm:$0xff]
    %v145 = vld [vmem:[#allocation3 + $0x240] sm:$0xff]
    %v146 = vld [vmem:[#allocation3 + $0x248] sm:$0xff]
    %v147 = vld [vmem:[#allocation3 + $0x250] sm:$0xff]
    %v148 = vld [vmem:[#allocation3 + $0x258] sm:$0xff]
    %v149 = vld [vmem:[#allocation3 + $0x260] sm:$0xff]
    %v150 = vld [vmem:[#allocation3 + $0x268] sm:$0xff]
    %v151 = vld [vmem:[#allocation3 + $0x270] sm:$0xff]
    %v152 = vld [vmem:[#allocation3 + $0x278] sm:$0xff]
    %v153 = vld [vmem:[#allocation3 + $0x280] sm:$0xff]
    %v154 = vld [vmem:[#allocation3 + $0x288] sm:$0xff]
    %v155 = vld [vmem:[#allocation3 + $0x290] sm:$0xff]
    %v156 = vld [vmem:[#allocation3 + $0x298] sm:$0xff]
    %v157 = vld [vmem:[#allocation3 + $0x2a0] sm:$0xff]
    %v158 = vld [vmem:[#allocation3 + $0x2a8] sm:$0xff]
    %v159 = vld [vmem:[#allocation3 + $0x2b0] sm:$0xff]
    %v160 = vld [vmem:[#allocation3 + $0x2b8] sm:$0xff]
    %v161 = vld [vmem:[#allocation3 + $0x2c0] sm:$0xff]
    %v162 = vld [vmem:[#allocation3 + $0x2c8] sm:$0xff]
    %v163 = vld [vmem:[#allocation3 + $0x2d0] sm:$0xff]
    %v164 = vld [vmem:[#allocation3 + $0x2d8] sm:$0xff]
    %v165 = vld [vmem:[#allocation3 + $0x2e0] sm:$0xff]
    %v166 = vld [vmem:[#allocation3 + $0x2e8] sm:$0xff]
    %v167 = vld [vmem:[#allocation3 + $0x2f0] sm:$0xff]
    %v168 = vld [vmem:[#allocation3 + $0x2f8] sm:$0xff]
    %v169 = vpack.c.bf16 %v79, %v73
    %v170 = vpack.c.bf16 %v80, %v74
    %v171 = vpack.c.bf16 %v81, %v75
    %v172 = vpack.c.bf16 %v82, %v76
    %v173 = vpack.c.bf16 %v83, %v77
    %v174 = vpack.c.bf16 %v84, %v78
    %v175 = vpack.c.bf16 %v91, %v85
    %v176 = vpack.c.bf16 %v92, %v86
    %v177 = vpack.c.bf16 %v93, %v87
    %v178 = vpack.c.bf16 %v94, %v88
    %v179 = vpack.c.bf16 %v95, %v89
    %v180 = vpack.c.bf16 %v96, %v90
    %v181 = vpack.c.bf16 %v103, %v97
    %v182 = vpack.c.bf16 %v104, %v98
    %v183 = vpack.c.bf16 %v105, %v99
    %v184 = vpack.c.bf16 %v106, %v100
    %v185 = vpack.c.bf16 %v107, %v101
    %v186 = vpack.c.bf16 %v108, %v102
    %v187 = vpack.c.bf16 %v115, %v109
    %v188 = vpack.c.bf16 %v116, %v110
    %v189 = vpack.c.bf16 %v117, %v111
    %v190 = vpack.c.bf16 %v118, %v112
    %v191 = vpack.c.bf16 %v119, %v113
    %v192 = vpack.c.bf16 %v120, %v114
    %v193 = vpack.c.bf16 %v127, %v121
    %v194 = vpack.c.bf16 %v128, %v122
    %v195 = vpack.c.bf16 %v129, %v123
    %v196 = vpack.c.bf16 %v130, %v124
    %v197 = vpack.c.bf16 %v131, %v125
    %v198 = vpack.c.bf16 %v132, %v126
    %v199 = vpack.c.bf16 %v139, %v133
    %v200 = vpack.c.bf16 %v140, %v134
    %v201 = vpack.c.bf16 %v141, %v135
    %v202 = vpack.c.bf16 %v142, %v136
    %v203 = vpack.c.bf16 %v143, %v137
    %v204 = vpack.c.bf16 %v144, %v138
    %v205 = vpack.c.bf16 %v151, %v145
    %v206 = vpack.c.bf16 %v152, %v146
    %v207 = vpack.c.bf16 %v153, %v147
    %v208 = vpack.c.bf16 %v154, %v148
    %v209 = vpack.c.bf16 %v155, %v149
    %v210 = vpack.c.bf16 %v156, %v150
    %v211 = vpack.c.bf16 %v163, %v157
    %v212 = vpack.c.bf16 %v164, %v158
    %v213 = vpack.c.bf16 %v165, %v159
    %v214 = vpack.c.bf16 %v166, %v160
    %v215 = vpack.c.bf16 %v167, %v161
    %v216 = vpack.c.bf16 %v168, %v162
    %v217 = vld [vmem:[#allocation6] sm:$0xff]
    %v218 = vld [vmem:[#allocation6 + $0x8] sm:$0xff]
    %v219 = vld [vmem:[#allocation6 + $0x10] sm:$0xff]
    %v220 = vld [vmem:[#allocation6 + $0x18] sm:$0xff]
    %v221 = vld [vmem:[#allocation6 + $0x20] sm:$0xff]
    %v222 = vld [vmem:[#allocation6 + $0x28] sm:$0xff]
    %v223 = vld [vmem:[#allocation6 + $0x30] sm:$0xff]
    %v224 = vld [vmem:[#allocation6 + $0x38] sm:$0xff]
    %v225 = vld [vmem:[#allocation6 + $0x40] sm:$0xff]
    %v226 = vld [vmem:[#allocation6 + $0x48] sm:$0xff]
    %v227 = vld [vmem:[#allocation6 + $0x50] sm:$0xff]
    %v228 = vld [vmem:[#allocation6 + $0x58] sm:$0xff]
    %v229 = vld [vmem:[#allocation6 + $0x60] sm:$0xff]
    %v230 = vld [vmem:[#allocation6 + $0x68] sm:$0xff]
    %v231 = vld [vmem:[#allocation6 + $0x70] sm:$0xff]
    %v232 = vld [vmem:[#allocation6 + $0x78] sm:$0xff]
    %v233 = vld [vmem:[#allocation6 + $0x80] sm:$0xff]
    %v234 = vld [vmem:[#allocation6 + $0x88] sm:$0xff]
    %v235 = vld [vmem:[#allocation6 + $0x90] sm:$0xff]
    %v236 = vld [vmem:[#allocation6 + $0x98] sm:$0xff]
    %v237 = vld [vmem:[#allocation6 + $0xa0] sm:$0xff]
    %v238 = vld [vmem:[#allocation6 + $0xa8] sm:$0xff]
    %v239 = vld [vmem:[#allocation6 + $0xb0] sm:$0xff]
    %v240 = vld [vmem:[#allocation6 + $0xb8] sm:$0xff]
    %v241 = vld [vmem:[#allocation6 + $0xc0] sm:$0xff]
    %v242 = vld [vmem:[#allocation6 + $0xc8] sm:$0xff]
    %v243 = vld [vmem:[#allocation6 + $0xd0] sm:$0xff]
    %v244 = vld [vmem:[#allocation6 + $0xd8] sm:$0xff]
    %v245 = vld [vmem:[#allocation6 + $0xe0] sm:$0xff]
    %v246 = vld [vmem:[#allocation6 + $0xe8] sm:$0xff]
    %v247 = vld [vmem:[#allocation6 + $0xf0] sm:$0xff]
    %v248 = vld [vmem:[#allocation6 + $0xf8] sm:$0xff]
    %v249 = vld [vmem:[#allocation6 + $0x100] sm:$0xff]
    %v250 = vld [vmem:[#allocation6 + $0x108] sm:$0xff]
    %v251 = vld [vmem:[#allocation6 + $0x110] sm:$0xff]
    %v252 = vld [vmem:[#allocation6 + $0x118] sm:$0xff]
    %v253 = vld [vmem:[#allocation6 + $0x120] sm:$0xff]
    %v254 = vld [vmem:[#allocation6 + $0x128] sm:$0xff]
    %v255 = vld [vmem:[#allocation6 + $0x130] sm:$0xff]
    %v256 = vld [vmem:[#allocation6 + $0x138] sm:$0xff]
    %v257 = vld [vmem:[#allocation6 + $0x140] sm:$0xff]
    %v258 = vld [vmem:[#allocation6 + $0x148] sm:$0xff]
    %v259 = vld [vmem:[#allocation6 + $0x150] sm:$0xff]
    %v260 = vld [vmem:[#allocation6 + $0x158] sm:$0xff]
    %v261 = vld [vmem:[#allocation6 + $0x160] sm:$0xff]
    %v262 = vld [vmem:[#allocation6 + $0x168] sm:$0xff]
    %v263 = vld [vmem:[#allocation6 + $0x170] sm:$0xff]
    %v264 = vld [vmem:[#allocation6 + $0x178] sm:$0xff]
    %v265 = vld [vmem:[#allocation6 + $0x180] sm:$0xff]
    %v266 = vld [vmem:[#allocation6 + $0x188] sm:$0xff]
    %v267 = vld [vmem:[#allocation6 + $0x190] sm:$0xff]
    %v268 = vld [vmem:[#allocation6 + $0x198] sm:$0xff]
    %v269 = vld [vmem:[#allocation6 + $0x1a0] sm:$0xff]
    %v270 = vld [vmem:[#allocation6 + $0x1a8] sm:$0xff]
    %v271 = vld [vmem:[#allocation6 + $0x1b0] sm:$0xff]
    %v272 = vld [vmem:[#allocation6 + $0x1b8] sm:$0xff]
    %v273 = vld [vmem:[#allocation6 + $0x1c0] sm:$0xff]
    %v274 = vld [vmem:[#allocation6 + $0x1c8] sm:$0xff]
    %v275 = vld [vmem:[#allocation6 + $0x1d0] sm:$0xff]
    %v276 = vld [vmem:[#allocation6 + $0x1d8] sm:$0xff]
    %v277 = vld [vmem:[#allocation6 + $0x1e0] sm:$0xff]
    %v278 = vld [vmem:[#allocation6 + $0x1e8] sm:$0xff]
    %v279 = vld [vmem:[#allocation6 + $0x1f0] sm:$0xff]
    %v280 = vld [vmem:[#allocation6 + $0x1f8] sm:$0xff]
    %v281 = vld [vmem:[#allocation6 + $0x200] sm:$0xff]
    %v282 = vld [vmem:[#allocation6 + $0x208] sm:$0xff]
    %v283 = vld [vmem:[#allocation6 + $0x210] sm:$0xff]
    %v284 = vld [vmem:[#allocation6 + $0x218] sm:$0xff]
    %v285 = vld [vmem:[#allocation6 + $0x220] sm:$0xff]
    %v286 = vld [vmem:[#allocation6 + $0x228] sm:$0xff]
    %v287 = vld [vmem:[#allocation6 + $0x230] sm:$0xff]
    %v288 = vld [vmem:[#allocation6 + $0x238] sm:$0xff]
    %v289 = vld [vmem:[#allocation6 + $0x240] sm:$0xff]
    %v290 = vld [vmem:[#allocation6 + $0x248] sm:$0xff]
    %v291 = vld [vmem:[#allocation6 + $0x250] sm:$0xff]
    %v292 = vld [vmem:[#allocation6 + $0x258] sm:$0xff]
    %v293 = vld [vmem:[#allocation6 + $0x260] sm:$0xff]
    %v294 = vld [vmem:[#allocation6 + $0x268] sm:$0xff]
    %v295 = vld [vmem:[#allocation6 + $0x270] sm:$0xff]
    %v296 = vld [vmem:[#allocation6 + $0x278] sm:$0xff]
    %v297 = vld [vmem:[#allocation6 + $0x280] sm:$0xff]
    %v298 = vld [vmem:[#allocation6 + $0x288] sm:$0xff]
    %v299 = vld [vmem:[#allocation6 + $0x290] sm:$0xff]
    %v300 = vld [vmem:[#allocation6 + $0x298] sm:$0xff]
    %v301 = vld [vmem:[#allocation6 + $0x2a0] sm:$0xff]
    %v302 = vld [vmem:[#allocation6 + $0x2a8] sm:$0xff]
    %v303 = vld [vmem:[#allocation6 + $0x2b0] sm:$0xff]
    %v304 = vld [vmem:[#allocation6 + $0x2b8] sm:$0xff]
    %v305 = vld [vmem:[#allocation6 + $0x2c0] sm:$0xff]
    %v306 = vld [vmem:[#allocation6 + $0x2c8] sm:$0xff]
    %v307 = vld [vmem:[#allocation6 + $0x2d0] sm:$0xff]
    %v308 = vld [vmem:[#allocation6 + $0x2d8] sm:$0xff]
    %v309 = vld [vmem:[#allocation6 + $0x2e0] sm:$0xff]
    %v310 = vld [vmem:[#allocation6 + $0x2e8] sm:$0xff]
    %v311 = vld [vmem:[#allocation6 + $0x2f0] sm:$0xff]
    %v312 = vld [vmem:[#allocation6 + $0x2f8] sm:$0xff]
    %v313 = vld [vmem:[#allocation6 + $0x300] sm:$0xff]
    %v314 = vld [vmem:[#allocation6 + $0x308] sm:$0xff]
    %v315 = vld [vmem:[#allocation6 + $0x310] sm:$0xff]
    %v316 = vld [vmem:[#allocation6 + $0x318] sm:$0xff]
    %v317 = vld [vmem:[#allocation6 + $0x320] sm:$0xff]
    %v318 = vld [vmem:[#allocation6 + $0x328] sm:$0xff]
    %v319 = vld [vmem:[#allocation6 + $0x330] sm:$0xff]
    %v320 = vld [vmem:[#allocation6 + $0x338] sm:$0xff]
    %v321 = vld [vmem:[#allocation6 + $0x340] sm:$0xff]
    %v322 = vld [vmem:[#allocation6 + $0x348] sm:$0xff]
    %v323 = vld [vmem:[#allocation6 + $0x350] sm:$0xff]
    %v324 = vld [vmem:[#allocation6 + $0x358] sm:$0xff]
    %v325 = vld [vmem:[#allocation6 + $0x360] sm:$0xff]
    %v326 = vld [vmem:[#allocation6 + $0x368] sm:$0xff]
    %v327 = vld [vmem:[#allocation6 + $0x370] sm:$0xff]
    %v328 = vld [vmem:[#allocation6 + $0x378] sm:$0xff]
    %v329 = vld [vmem:[#allocation6 + $0x380] sm:$0xff]
    %v330 = vld [vmem:[#allocation6 + $0x388] sm:$0xff]
    %v331 = vld [vmem:[#allocation6 + $0x390] sm:$0xff]
    %v332 = vld [vmem:[#allocation6 + $0x398] sm:$0xff]
    %v333 = vld [vmem:[#allocation6 + $0x3a0] sm:$0xff]
    %v334 = vld [vmem:[#allocation6 + $0x3a8] sm:$0xff]
    %v335 = vld [vmem:[#allocation6 + $0x3b0] sm:$0xff]
    %v336 = vld [vmem:[#allocation6 + $0x3b8] sm:$0xff]
    %v337 = vld [vmem:[#allocation6 + $0x3c0] sm:$0xff]
    %v338 = vld [vmem:[#allocation6 + $0x3c8] sm:$0xff]
    %v339 = vld [vmem:[#allocation6 + $0x3d0] sm:$0xff]
    %v340 = vld [vmem:[#allocation6 + $0x3d8] sm:$0xff]
    %v341 = vld [vmem:[#allocation6 + $0x3e0] sm:$0xff]
    %v342 = vld [vmem:[#allocation6 + $0x3e8] sm:$0xff]
    %v343 = vld [vmem:[#allocation6 + $0x3f0] sm:$0xff]
    %v344 = vld [vmem:[#allocation6 + $0x3f8] sm:$0xff]
    %v345 = vld [vmem:[#allocation6 + $0x400] sm:$0xff]
    %v346 = vld [vmem:[#allocation6 + $0x408] sm:$0xff]
    %v347 = vld [vmem:[#allocation6 + $0x410] sm:$0xff]
    %v348 = vld [vmem:[#allocation6 + $0x418] sm:$0xff]
    %v349 = vld [vmem:[#allocation6 + $0x420] sm:$0xff]
    %v350 = vld [vmem:[#allocation6 + $0x428] sm:$0xff]
    %v351 = vld [vmem:[#allocation6 + $0x430] sm:$0xff]
    %v352 = vld [vmem:[#allocation6 + $0x438] sm:$0xff]
    %v353 = vld [vmem:[#allocation6 + $0x440] sm:$0xff]
    %v354 = vld [vmem:[#allocation6 + $0x448] sm:$0xff]
    %v355 = vld [vmem:[#allocation6 + $0x450] sm:$0xff]
    %v356 = vld [vmem:[#allocation6 + $0x458] sm:$0xff]
    %v357 = vld [vmem:[#allocation6 + $0x460] sm:$0xff]
    %v358 = vld [vmem:[#allocation6 + $0x468] sm:$0xff]
    %v359 = vld [vmem:[#allocation6 + $0x470] sm:$0xff]
    %v360 = vld [vmem:[#allocation6 + $0x478] sm:$0xff]
    %v361 = vld [vmem:[#allocation6 + $0x480] sm:$0xff]
    %v362 = vld [vmem:[#allocation6 + $0x488] sm:$0xff]
    %v363 = vld [vmem:[#allocation6 + $0x490] sm:$0xff]
    %v364 = vld [vmem:[#allocation6 + $0x498] sm:$0xff]
    %v365 = vld [vmem:[#allocation6 + $0x4a0] sm:$0xff]
    %v366 = vld [vmem:[#allocation6 + $0x4a8] sm:$0xff]
    %v367 = vld [vmem:[#allocation6 + $0x4b0] sm:$0xff]
    %v368 = vld [vmem:[#allocation6 + $0x4b8] sm:$0xff]
    %v369 = vld [vmem:[#allocation6 + $0x4c0] sm:$0xff]
    %v370 = vld [vmem:[#allocation6 + $0x4c8] sm:$0xff]
    %v371 = vld [vmem:[#allocation6 + $0x4d0] sm:$0xff]
    %v372 = vld [vmem:[#allocation6 + $0x4d8] sm:$0xff]
    %v373 = vld [vmem:[#allocation6 + $0x4e0] sm:$0xff]
    %v374 = vld [vmem:[#allocation6 + $0x4e8] sm:$0xff]
    %v375 = vld [vmem:[#allocation6 + $0x4f0] sm:$0xff]
    %v376 = vld [vmem:[#allocation6 + $0x4f8] sm:$0xff]
    %v377 = vld [vmem:[#allocation6 + $0x500] sm:$0xff]
    %v378 = vld [vmem:[#allocation6 + $0x508] sm:$0xff]
    %v379 = vld [vmem:[#allocation6 + $0x510] sm:$0xff]
    %v380 = vld [vmem:[#allocation6 + $0x518] sm:$0xff]
    %v381 = vld [vmem:[#allocation6 + $0x520] sm:$0xff]
    %v382 = vld [vmem:[#allocation6 + $0x528] sm:$0xff]
    %v383 = vld [vmem:[#allocation6 + $0x530] sm:$0xff]
    %v384 = vld [vmem:[#allocation6 + $0x538] sm:$0xff]
    %v385 = vld [vmem:[#allocation6 + $0x540] sm:$0xff]
    %v386 = vld [vmem:[#allocation6 + $0x548] sm:$0xff]
    %v387 = vld [vmem:[#allocation6 + $0x550] sm:$0xff]
    %v388 = vld [vmem:[#allocation6 + $0x558] sm:$0xff]
    %v389 = vld [vmem:[#allocation6 + $0x560] sm:$0xff]
    %v390 = vld [vmem:[#allocation6 + $0x568] sm:$0xff]
    %v391 = vld [vmem:[#allocation6 + $0x570] sm:$0xff]
    %v392 = vld [vmem:[#allocation6 + $0x578] sm:$0xff]
    %v393 = vld [vmem:[#allocation6 + $0x580] sm:$0xff]
    %v394 = vld [vmem:[#allocation6 + $0x588] sm:$0xff]
    %v395 = vld [vmem:[#allocation6 + $0x590] sm:$0xff]
    %v396 = vld [vmem:[#allocation6 + $0x598] sm:$0xff]
    %v397 = vld [vmem:[#allocation6 + $0x5a0] sm:$0xff]
    %v398 = vld [vmem:[#allocation6 + $0x5a8] sm:$0xff]
    %v399 = vld [vmem:[#allocation6 + $0x5b0] sm:$0xff]
    %v400 = vld [vmem:[#allocation6 + $0x5b8] sm:$0xff]
    %v401 = vld [vmem:[#allocation6 + $0x5c0] sm:$0xff]
    %v402 = vld [vmem:[#allocation6 + $0x5c8] sm:$0xff]
    %v403 = vld [vmem:[#allocation6 + $0x5d0] sm:$0xff]
    %v404 = vld [vmem:[#allocation6 + $0x5d8] sm:$0xff]
    %v405 = vld [vmem:[#allocation6 + $0x5e0] sm:$0xff]
    %v406 = vld [vmem:[#allocation6 + $0x5e8] sm:$0xff]
    %v407 = vld [vmem:[#allocation6 + $0x5f0] sm:$0xff]
    %v408 = vld [vmem:[#allocation6 + $0x5f8] sm:$0xff]
    %v409 = vld [vmem:[#allocation6 + $0x600] sm:$0xff]
    %v410 = vld [vmem:[#allocation6 + $0x608] sm:$0xff]
    %v411 = vld [vmem:[#allocation6 + $0x610] sm:$0xff]
    %v412 = vld [vmem:[#allocation6 + $0x618] sm:$0xff]
    %v413 = vld [vmem:[#allocation6 + $0x620] sm:$0xff]
    %v414 = vld [vmem:[#allocation6 + $0x628] sm:$0xff]
    %v415 = vld [vmem:[#allocation6 + $0x630] sm:$0xff]
    %v416 = vld [vmem:[#allocation6 + $0x638] sm:$0xff]
    %v417 = vld [vmem:[#allocation6 + $0x640] sm:$0xff]
    %v418 = vld [vmem:[#allocation6 + $0x648] sm:$0xff]
    %v419 = vld [vmem:[#allocation6 + $0x650] sm:$0xff]
    %v420 = vld [vmem:[#allocation6 + $0x658] sm:$0xff]
    %v421 = vld [vmem:[#allocation6 + $0x660] sm:$0xff]
    %v422 = vld [vmem:[#allocation6 + $0x668] sm:$0xff]
    %v423 = vld [vmem:[#allocation6 + $0x670] sm:$0xff]
    %v424 = vld [vmem:[#allocation6 + $0x678] sm:$0xff]
    %v425 = vld [vmem:[#allocation6 + $0x680] sm:$0xff]
    %v426 = vld [vmem:[#allocation6 + $0x688] sm:$0xff]
    %v427 = vld [vmem:[#allocation6 + $0x690] sm:$0xff]
    %v428 = vld [vmem:[#allocation6 + $0x698] sm:$0xff]
    %v429 = vld [vmem:[#allocation6 + $0x6a0] sm:$0xff]
    %v430 = vld [vmem:[#allocation6 + $0x6a8] sm:$0xff]
    %v431 = vld [vmem:[#allocation6 + $0x6b0] sm:$0xff]
    %v432 = vld [vmem:[#allocation6 + $0x6b8] sm:$0xff]
    %v433 = vld [vmem:[#allocation6 + $0x6c0] sm:$0xff]
    %v434 = vld [vmem:[#allocation6 + $0x6c8] sm:$0xff]
    %v435 = vld [vmem:[#allocation6 + $0x6d0] sm:$0xff]
    %v436 = vld [vmem:[#allocation6 + $0x6d8] sm:$0xff]
    %v437 = vld [vmem:[#allocation6 + $0x6e0] sm:$0xff]
    %v438 = vld [vmem:[#allocation6 + $0x6e8] sm:$0xff]
    %v439 = vld [vmem:[#allocation6 + $0x6f0] sm:$0xff]
    %v440 = vld [vmem:[#allocation6 + $0x6f8] sm:$0xff]
    %v441 = vld [vmem:[#allocation6 + $0x700] sm:$0xff]
    %v442 = vld [vmem:[#allocation6 + $0x708] sm:$0xff]
    %v443 = vld [vmem:[#allocation6 + $0x710] sm:$0xff]
    %v444 = vld [vmem:[#allocation6 + $0x718] sm:$0xff]
    %v445 = vld [vmem:[#allocation6 + $0x720] sm:$0xff]
    %v446 = vld [vmem:[#allocation6 + $0x728] sm:$0xff]
    %v447 = vld [vmem:[#allocation6 + $0x730] sm:$0xff]
    %v448 = vld [vmem:[#allocation6 + $0x738] sm:$0xff]
    %v449 = vld [vmem:[#allocation6 + $0x740] sm:$0xff]
    %v450 = vld [vmem:[#allocation6 + $0x748] sm:$0xff]
    %v451 = vld [vmem:[#allocation6 + $0x750] sm:$0xff]
    %v452 = vld [vmem:[#allocation6 + $0x758] sm:$0xff]
    %v453 = vld [vmem:[#allocation6 + $0x760] sm:$0xff]
    %v454 = vld [vmem:[#allocation6 + $0x768] sm:$0xff]
    %v455 = vld [vmem:[#allocation6 + $0x770] sm:$0xff]
    %v456 = vld [vmem:[#allocation6 + $0x778] sm:$0xff]
    %v457 = vld [vmem:[#allocation6 + $0x780] sm:$0xff]
    %v458 = vld [vmem:[#allocation6 + $0x788] sm:$0xff]
    %v459 = vld [vmem:[#allocation6 + $0x790] sm:$0xff]
    %v460 = vld [vmem:[#allocation6 + $0x798] sm:$0xff]
    %v461 = vld [vmem:[#allocation6 + $0x7a0] sm:$0xff]
    %v462 = vld [vmem:[#allocation6 + $0x7a8] sm:$0xff]
    %v463 = vld [vmem:[#allocation6 + $0x7b0] sm:$0xff]
    %v464 = vld [vmem:[#allocation6 + $0x7b8] sm:$0xff]
    %v465 = vld [vmem:[#allocation6 + $0x7c0] sm:$0xff]
    %v466 = vld [vmem:[#allocation6 + $0x7c8] sm:$0xff]
    %v467 = vld [vmem:[#allocation6 + $0x7d0] sm:$0xff]
    %v468 = vld [vmem:[#allocation6 + $0x7d8] sm:$0xff]
    %v469 = vld [vmem:[#allocation6 + $0x7e0] sm:$0xff]
    %v470 = vld [vmem:[#allocation6 + $0x7e8] sm:$0xff]
    %v471 = vld [vmem:[#allocation6 + $0x7f0] sm:$0xff]
    %v472 = vld [vmem:[#allocation6 + $0x7f8] sm:$0xff]
    %v473 = vld [vmem:[#allocation6 + $0x800] sm:$0xff]
    %v474 = vld [vmem:[#allocation6 + $0x808] sm:$0xff]
    %v475 = vld [vmem:[#allocation6 + $0x810] sm:$0xff]
    %v476 = vld [vmem:[#allocation6 + $0x818] sm:$0xff]
    %v477 = vld [vmem:[#allocation6 + $0x820] sm:$0xff]
    %v478 = vld [vmem:[#allocation6 + $0x828] sm:$0xff]
    %v479 = vld [vmem:[#allocation6 + $0x830] sm:$0xff]
    %v480 = vld [vmem:[#allocation6 + $0x838] sm:$0xff]
    %v481 = vld [vmem:[#allocation6 + $0x840] sm:$0xff]
    %v482 = vld [vmem:[#allocation6 + $0x848] sm:$0xff]
    %v483 = vld [vmem:[#allocation6 + $0x850] sm:$0xff]
    %v484 = vld [vmem:[#allocation6 + $0x858] sm:$0xff]
    %v485 = vld [vmem:[#allocation6 + $0x860] sm:$0xff]
    %v486 = vld [vmem:[#allocation6 + $0x868] sm:$0xff]
    %v487 = vld [vmem:[#allocation6 + $0x870] sm:$0xff]
    %v488 = vld [vmem:[#allocation6 + $0x878] sm:$0xff]
    %v489 = vld [vmem:[#allocation6 + $0x880] sm:$0xff]
    %v490 = vld [vmem:[#allocation6 + $0x888] sm:$0xff]
    %v491 = vld [vmem:[#allocation6 + $0x890] sm:$0xff]
    %v492 = vld [vmem:[#allocation6 + $0x898] sm:$0xff]
    %v493 = vld [vmem:[#allocation6 + $0x8a0] sm:$0xff]
    %v494 = vld [vmem:[#allocation6 + $0x8a8] sm:$0xff]
    %v495 = vld [vmem:[#allocation6 + $0x8b0] sm:$0xff]
    %v496 = vld [vmem:[#allocation6 + $0x8b8] sm:$0xff]
    %v497 = vld [vmem:[#allocation6 + $0x8c0] sm:$0xff]
    %v498 = vld [vmem:[#allocation6 + $0x8c8] sm:$0xff]
    %v499 = vld [vmem:[#allocation6 + $0x8d0] sm:$0xff]
    %v500 = vld [vmem:[#allocation6 + $0x8d8] sm:$0xff]
    %v501 = vld [vmem:[#allocation6 + $0x8e0] sm:$0xff]
    %v502 = vld [vmem:[#allocation6 + $0x8e8] sm:$0xff]
    %v503 = vld [vmem:[#allocation6 + $0x8f0] sm:$0xff]
    %v504 = vld [vmem:[#allocation6 + $0x8f8] sm:$0xff]
    %v505 = vld [vmem:[#allocation8] sm:$0x3f]
    %v507 = vlaneseq
    %v508 = vshrl.u32 %v507, 7
    %v509 = vsub.s32 0, %v508
    %v510 = vrot.slane %v505, %v509
    %v511 = vlaneseq
    %v512 = vshrl.u32 %v511, 7
    %v513 = vsub.s32 1, %v512
    %v514 = vrot.slane %v505, %v513
    %v515 = vlaneseq
    %v516 = vshrl.u32 %v515, 7
    %v517 = vsub.s32 2, %v516
    %v518 = vrot.slane %v505, %v517
    %v519 = vlaneseq
    %v520 = vshrl.u32 %v519, 7
    %v521 = vsub.s32 3, %v520
    %v522 = vrot.slane %v505, %v521
    %v523 = vlaneseq
    %v524 = vshrl.u32 %v523, 7
    %v525 = vsub.s32 4, %v524
    %v526 = vrot.slane %v505, %v525
    %v527 = vlaneseq
    %v528 = vshrl.u32 %v527, 7
    %v529 = vsub.s32 5, %v528
    %v530 = vrot.slane %v505, %v529
    %v825 = vunpack.c.l.b16 %v217
    %v826 = vunpack.c.h.b16 %v217
    %v827 = vunpack.c.l.b16 %v218
    %v828 = vunpack.c.h.b16 %v218
    %v829 = vunpack.c.l.b16 %v219
    %v830 = vunpack.c.h.b16 %v219
    %v831 = vunpack.c.l.b16 %v220
    %v832 = vunpack.c.h.b16 %v220
    %v833 = vunpack.c.l.b16 %v221
    %v834 = vunpack.c.h.b16 %v221
    %v835 = vunpack.c.l.b16 %v222
    %v836 = vunpack.c.h.b16 %v222
    %v837 = vunpack.c.l.b16 %v223
    %v838 = vunpack.c.h.b16 %v223
    %v839 = vunpack.c.l.b16 %v224
    %v840 = vunpack.c.h.b16 %v224
    %v841 = vunpack.c.l.b16 %v225
    %v842 = vunpack.c.h.b16 %v225
    %v843 = vunpack.c.l.b16 %v226
    %v844 = vunpack.c.h.b16 %v226
    %v845 = vunpack.c.l.b16 %v227
    %v846 = vunpack.c.h.b16 %v227
    %v847 = vunpack.c.l.b16 %v228
    %v848 = vunpack.c.h.b16 %v228
    %v849 = vunpack.c.l.b16 %v229
    %v850 = vunpack.c.h.b16 %v229
    %v851 = vunpack.c.l.b16 %v230
    %v852 = vunpack.c.h.b16 %v230
    %v853 = vunpack.c.l.b16 %v231
    %v854 = vunpack.c.h.b16 %v231
    %v855 = vunpack.c.l.b16 %v232
    %v856 = vunpack.c.h.b16 %v232
    %v857 = vunpack.c.l.b16 %v233
    %v858 = vunpack.c.h.b16 %v233
    %v859 = vunpack.c.l.b16 %v234
    %v860 = vunpack.c.h.b16 %v234
    %v861 = vunpack.c.l.b16 %v235
    %v862 = vunpack.c.h.b16 %v235
    %v863 = vunpack.c.l.b16 %v236
    %v864 = vunpack.c.h.b16 %v236
    %v865 = vunpack.c.l.b16 %v237
    %v866 = vunpack.c.h.b16 %v237
    %v867 = vunpack.c.l.b16 %v238
    %v868 = vunpack.c.h.b16 %v238
    %v869 = vunpack.c.l.b16 %v239
    %v870 = vunpack.c.h.b16 %v239
    %v871 = vunpack.c.l.b16 %v240
    %v872 = vunpack.c.h.b16 %v240
    %v873 = vunpack.c.l.b16 %v241
    %v874 = vunpack.c.h.b16 %v241
    %v875 = vunpack.c.l.b16 %v242
    %v876 = vunpack.c.h.b16 %v242
    %v877 = vunpack.c.l.b16 %v243
    %v878 = vunpack.c.h.b16 %v243
    %v879 = vunpack.c.l.b16 %v244
    %v880 = vunpack.c.h.b16 %v244
    %v881 = vunpack.c.l.b16 %v245
    %v882 = vunpack.c.h.b16 %v245
    %v883 = vunpack.c.l.b16 %v246
    %v884 = vunpack.c.h.b16 %v246
    %v885 = vunpack.c.l.b16 %v247
    %v886 = vunpack.c.h.b16 %v247
    %v887 = vunpack.c.l.b16 %v248
    %v888 = vunpack.c.h.b16 %v248
    %v889 = vunpack.c.l.b16 %v249
    %v890 = vunpack.c.h.b16 %v249
    %v891 = vunpack.c.l.b16 %v250
    %v892 = vunpack.c.h.b16 %v250
    %v893 = vunpack.c.l.b16 %v251
    %v894 = vunpack.c.h.b16 %v251
    %v895 = vunpack.c.l.b16 %v252
    %v896 = vunpack.c.h.b16 %v252
    %v897 = vunpack.c.l.b16 %v253
    %v898 = vunpack.c.h.b16 %v253
    %v899 = vunpack.c.l.b16 %v254
    %v900 = vunpack.c.h.b16 %v254
    %v901 = vunpack.c.l.b16 %v255
    %v902 = vunpack.c.h.b16 %v255
    %v903 = vunpack.c.l.b16 %v256
    %v904 = vunpack.c.h.b16 %v256
    %v905 = vunpack.c.l.b16 %v257
    %v906 = vunpack.c.h.b16 %v257
    %v907 = vunpack.c.l.b16 %v258
    %v908 = vunpack.c.h.b16 %v258
    %v909 = vunpack.c.l.b16 %v259
    %v910 = vunpack.c.h.b16 %v259
    %v911 = vunpack.c.l.b16 %v260
    %v912 = vunpack.c.h.b16 %v260
    %v913 = vunpack.c.l.b16 %v261
    %v914 = vunpack.c.h.b16 %v261
    %v915 = vunpack.c.l.b16 %v262
    %v916 = vunpack.c.h.b16 %v262
    %v917 = vunpack.c.l.b16 %v263
    %v918 = vunpack.c.h.b16 %v263
    %v919 = vunpack.c.l.b16 %v264
    %v920 = vunpack.c.h.b16 %v264
    %v921 = vunpack.c.l.b16 %v265
    %v922 = vunpack.c.h.b16 %v265
    %v923 = vunpack.c.l.b16 %v266
    %v924 = vunpack.c.h.b16 %v266
    %v925 = vunpack.c.l.b16 %v267
    %v926 = vunpack.c.h.b16 %v267
    %v927 = vunpack.c.l.b16 %v268
    %v928 = vunpack.c.h.b16 %v268
    %v929 = vunpack.c.l.b16 %v269
    %v930 = vunpack.c.h.b16 %v269
    %v931 = vunpack.c.l.b16 %v270
    %v932 = vunpack.c.h.b16 %v270
    %v933 = vunpack.c.l.b16 %v271
    %v934 = vunpack.c.h.b16 %v271
    %v935 = vunpack.c.l.b16 %v272
    %v936 = vunpack.c.h.b16 %v272
    %v937 = vunpack.c.l.b16 %v273
    %v938 = vunpack.c.h.b16 %v273
    %v939 = vunpack.c.l.b16 %v274
    %v940 = vunpack.c.h.b16 %v274
    %v941 = vunpack.c.l.b16 %v275
    %v942 = vunpack.c.h.b16 %v275
    %v943 = vunpack.c.l.b16 %v276
    %v944 = vunpack.c.h.b16 %v276
    %v945 = vunpack.c.l.b16 %v277
    %v946 = vunpack.c.h.b16 %v277
    %v947 = vunpack.c.l.b16 %v278
    %v948 = vunpack.c.h.b16 %v278
    %v949 = vunpack.c.l.b16 %v279
    %v950 = vunpack.c.h.b16 %v279
    %v951 = vunpack.c.l.b16 %v280
    %v952 = vunpack.c.h.b16 %v280
    %v953 = vunpack.c.l.b16 %v281
    %v954 = vunpack.c.h.b16 %v281
    %v955 = vunpack.c.l.b16 %v282
    %v956 = vunpack.c.h.b16 %v282
    %v957 = vunpack.c.l.b16 %v283
    %v958 = vunpack.c.h.b16 %v283
    %v959 = vunpack.c.l.b16 %v284
    %v960 = vunpack.c.h.b16 %v284
    %v961 = vunpack.c.l.b16 %v285
    %v962 = vunpack.c.h.b16 %v285
    %v963 = vunpack.c.l.b16 %v286
    %v964 = vunpack.c.h.b16 %v286
    %v965 = vunpack.c.l.b16 %v287
    %v966 = vunpack.c.h.b16 %v287
    %v967 = vunpack.c.l.b16 %v288
    %v968 = vunpack.c.h.b16 %v288
    %v969 = vunpack.c.l.b16 %v289
    %v970 = vunpack.c.h.b16 %v289
    %v971 = vunpack.c.l.b16 %v290
    %v972 = vunpack.c.h.b16 %v290
    %v973 = vunpack.c.l.b16 %v291
    %v974 = vunpack.c.h.b16 %v291
    %v975 = vunpack.c.l.b16 %v292
    %v976 = vunpack.c.h.b16 %v292
    %v977 = vunpack.c.l.b16 %v293
    %v978 = vunpack.c.h.b16 %v293
    %v979 = vunpack.c.l.b16 %v294
    %v980 = vunpack.c.h.b16 %v294
    %v981 = vunpack.c.l.b16 %v295
    %v982 = vunpack.c.h.b16 %v295
    %v983 = vunpack.c.l.b16 %v296
    %v984 = vunpack.c.h.b16 %v296
    %v985 = vunpack.c.l.b16 %v297
    %v986 = vunpack.c.h.b16 %v297
    %v987 = vunpack.c.l.b16 %v298
    %v988 = vunpack.c.h.b16 %v298
    %v989 = vunpack.c.l.b16 %v299
    %v990 = vunpack.c.h.b16 %v299
    %v991 = vunpack.c.l.b16 %v300
    %v992 = vunpack.c.h.b16 %v300
    %v993 = vunpack.c.l.b16 %v301
    %v994 = vunpack.c.h.b16 %v301
    %v995 = vunpack.c.l.b16 %v302
    %v996 = vunpack.c.h.b16 %v302
    %v997 = vunpack.c.l.b16 %v303
    %v998 = vunpack.c.h.b16 %v303
    %v999 = vunpack.c.l.b16 %v304
    %v1000 = vunpack.c.h.b16 %v304
    %v1001 = vunpack.c.l.b16 %v305
    %v1002 = vunpack.c.h.b16 %v305
    %v1003 = vunpack.c.l.b16 %v306
    %v1004 = vunpack.c.h.b16 %v306
    %v1005 = vunpack.c.l.b16 %v307
    %v1006 = vunpack.c.h.b16 %v307
    %v1007 = vunpack.c.l.b16 %v308
    %v1008 = vunpack.c.h.b16 %v308
    %v1009 = vunpack.c.l.b16 %v309
    %v1010 = vunpack.c.h.b16 %v309
    %v1011 = vunpack.c.l.b16 %v310
    %v1012 = vunpack.c.h.b16 %v310
    %v1013 = vunpack.c.l.b16 %v311
    %v1014 = vunpack.c.h.b16 %v311
    %v1015 = vunpack.c.l.b16 %v312
    %v1016 = vunpack.c.h.b16 %v312
    %v1017 = vunpack.c.l.b16 %v313
    %v1018 = vunpack.c.h.b16 %v313
    %v1019 = vunpack.c.l.b16 %v314
    %v1020 = vunpack.c.h.b16 %v314
    %v1021 = vunpack.c.l.b16 %v315
    %v1022 = vunpack.c.h.b16 %v315
    %v1023 = vunpack.c.l.b16 %v316
    %v1024 = vunpack.c.h.b16 %v316
    %v1025 = vunpack.c.l.b16 %v317
    %v1026 = vunpack.c.h.b16 %v317
    %v1027 = vunpack.c.l.b16 %v318
    %v1028 = vunpack.c.h.b16 %v318
    %v1029 = vunpack.c.l.b16 %v319
    %v1030 = vunpack.c.h.b16 %v319
    %v1031 = vunpack.c.l.b16 %v320
    %v1032 = vunpack.c.h.b16 %v320
    %v1033 = vunpack.c.l.b16 %v321
    %v1034 = vunpack.c.h.b16 %v321
    %v1035 = vunpack.c.l.b16 %v322
    %v1036 = vunpack.c.h.b16 %v322
    %v1037 = vunpack.c.l.b16 %v323
    %v1038 = vunpack.c.h.b16 %v323
    %v1039 = vunpack.c.l.b16 %v324
    %v1040 = vunpack.c.h.b16 %v324
    %v1041 = vunpack.c.l.b16 %v325
    %v1042 = vunpack.c.h.b16 %v325
    %v1043 = vunpack.c.l.b16 %v326
    %v1044 = vunpack.c.h.b16 %v326
    %v1045 = vunpack.c.l.b16 %v327
    %v1046 = vunpack.c.h.b16 %v327
    %v1047 = vunpack.c.l.b16 %v328
    %v1048 = vunpack.c.h.b16 %v328
    %v1049 = vunpack.c.l.b16 %v329
    %v1050 = vunpack.c.h.b16 %v329
    %v1051 = vunpack.c.l.b16 %v330
    %v1052 = vunpack.c.h.b16 %v330
    %v1053 = vunpack.c.l.b16 %v331
    %v1054 = vunpack.c.h.b16 %v331
    %v1055 = vunpack.c.l.b16 %v332
    %v1056 = vunpack.c.h.b16 %v332
    %v1057 = vunpack.c.l.b16 %v333
    %v1058 = vunpack.c.h.b16 %v333
    %v1059 = vunpack.c.l.b16 %v334
    %v1060 = vunpack.c.h.b16 %v334
    %v1061 = vunpack.c.l.b16 %v335
    %v1062 = vunpack.c.h.b16 %v335
    %v1063 = vunpack.c.l.b16 %v336
    %v1064 = vunpack.c.h.b16 %v336
    %v1065 = vunpack.c.l.b16 %v337
    %v1066 = vunpack.c.h.b16 %v337
    %v1067 = vunpack.c.l.b16 %v338
    %v1068 = vunpack.c.h.b16 %v338
    %v1069 = vunpack.c.l.b16 %v339
    %v1070 = vunpack.c.h.b16 %v339
    %v1071 = vunpack.c.l.b16 %v340
    %v1072 = vunpack.c.h.b16 %v340
    %v1073 = vunpack.c.l.b16 %v341
    %v1074 = vunpack.c.h.b16 %v341
    %v1075 = vunpack.c.l.b16 %v342
    %v1076 = vunpack.c.h.b16 %v342
    %v1077 = vunpack.c.l.b16 %v343
    %v1078 = vunpack.c.h.b16 %v343
    %v1079 = vunpack.c.l.b16 %v344
    %v1080 = vunpack.c.h.b16 %v344
    %v1081 = vunpack.c.l.b16 %v345
    %v1082 = vunpack.c.h.b16 %v345
    %v1083 = vunpack.c.l.b16 %v346
    %v1084 = vunpack.c.h.b16 %v346
    %v1085 = vunpack.c.l.b16 %v347
    %v1086 = vunpack.c.h.b16 %v347
    %v1087 = vunpack.c.l.b16 %v348
    %v1088 = vunpack.c.h.b16 %v348
    %v1089 = vunpack.c.l.b16 %v349
    %v1090 = vunpack.c.h.b16 %v349
    %v1091 = vunpack.c.l.b16 %v350
    %v1092 = vunpack.c.h.b16 %v350
    %v1093 = vunpack.c.l.b16 %v351
    %v1094 = vunpack.c.h.b16 %v351
    %v1095 = vunpack.c.l.b16 %v352
    %v1096 = vunpack.c.h.b16 %v352
    %v1097 = vunpack.c.l.b16 %v353
    %v1098 = vunpack.c.h.b16 %v353
    %v1099 = vunpack.c.l.b16 %v354
    %v1100 = vunpack.c.h.b16 %v354
    %v1101 = vunpack.c.l.b16 %v355
    %v1102 = vunpack.c.h.b16 %v355
    %v1103 = vunpack.c.l.b16 %v356
    %v1104 = vunpack.c.h.b16 %v356
    %v1105 = vunpack.c.l.b16 %v357
    %v1106 = vunpack.c.h.b16 %v357
    %v1107 = vunpack.c.l.b16 %v358
    %v1108 = vunpack.c.h.b16 %v358
    %v1109 = vunpack.c.l.b16 %v359
    %v1110 = vunpack.c.h.b16 %v359
    %v1111 = vunpack.c.l.b16 %v360
    %v1112 = vunpack.c.h.b16 %v360
    %v1113 = vunpack.c.l.b16 %v361
    %v1114 = vunpack.c.h.b16 %v361
    %v1115 = vunpack.c.l.b16 %v362
    %v1116 = vunpack.c.h.b16 %v362
    %v1117 = vunpack.c.l.b16 %v363
    %v1118 = vunpack.c.h.b16 %v363
    %v1119 = vunpack.c.l.b16 %v364
    %v1120 = vunpack.c.h.b16 %v364
    %v1121 = vunpack.c.l.b16 %v365
    %v1122 = vunpack.c.h.b16 %v365
    %v1123 = vunpack.c.l.b16 %v366
    %v1124 = vunpack.c.h.b16 %v366
    %v1125 = vunpack.c.l.b16 %v367
    %v1126 = vunpack.c.h.b16 %v367
    %v1127 = vunpack.c.l.b16 %v368
    %v1128 = vunpack.c.h.b16 %v368
    %v1129 = vunpack.c.l.b16 %v369
    %v1130 = vunpack.c.h.b16 %v369
    %v1131 = vunpack.c.l.b16 %v370
    %v1132 = vunpack.c.h.b16 %v370
    %v1133 = vunpack.c.l.b16 %v371
    %v1134 = vunpack.c.h.b16 %v371
    %v1135 = vunpack.c.l.b16 %v372
    %v1136 = vunpack.c.h.b16 %v372
    %v1137 = vunpack.c.l.b16 %v373
    %v1138 = vunpack.c.h.b16 %v373
    %v1139 = vunpack.c.l.b16 %v374
    %v1140 = vunpack.c.h.b16 %v374
    %v1141 = vunpack.c.l.b16 %v375
    %v1142 = vunpack.c.h.b16 %v375
    %v1143 = vunpack.c.l.b16 %v376
    %v1144 = vunpack.c.h.b16 %v376
    %v1145 = vunpack.c.l.b16 %v377
    %v1146 = vunpack.c.h.b16 %v377
    %v1147 = vunpack.c.l.b16 %v378
    %v1148 = vunpack.c.h.b16 %v378
    %v1149 = vunpack.c.l.b16 %v379
    %v1150 = vunpack.c.h.b16 %v379
    %v1151 = vunpack.c.l.b16 %v380
    %v1152 = vunpack.c.h.b16 %v380
    %v1153 = vunpack.c.l.b16 %v381
    %v1154 = vunpack.c.h.b16 %v381
    %v1155 = vunpack.c.l.b16 %v382
    %v1156 = vunpack.c.h.b16 %v382
    %v1157 = vunpack.c.l.b16 %v383
    %v1158 = vunpack.c.h.b16 %v383
    %v1159 = vunpack.c.l.b16 %v384
    %v1160 = vunpack.c.h.b16 %v384
    %v1161 = vunpack.c.l.b16 %v385
    %v1162 = vunpack.c.h.b16 %v385
    %v1163 = vunpack.c.l.b16 %v386
    %v1164 = vunpack.c.h.b16 %v386
    %v1165 = vunpack.c.l.b16 %v387
    %v1166 = vunpack.c.h.b16 %v387
    %v1167 = vunpack.c.l.b16 %v388
    %v1168 = vunpack.c.h.b16 %v388
    %v1169 = vunpack.c.l.b16 %v389
    %v1170 = vunpack.c.h.b16 %v389
    %v1171 = vunpack.c.l.b16 %v390
    %v1172 = vunpack.c.h.b16 %v390
    %v1173 = vunpack.c.l.b16 %v391
    %v1174 = vunpack.c.h.b16 %v391
    %v1175 = vunpack.c.l.b16 %v392
    %v1176 = vunpack.c.h.b16 %v392
    %v1177 = vunpack.c.l.b16 %v393
    %v1178 = vunpack.c.h.b16 %v393
    %v1179 = vunpack.c.l.b16 %v394
    %v1180 = vunpack.c.h.b16 %v394
    %v1181 = vunpack.c.l.b16 %v395
    %v1182 = vunpack.c.h.b16 %v395
    %v1183 = vunpack.c.l.b16 %v396
    %v1184 = vunpack.c.h.b16 %v396
    %v1185 = vunpack.c.l.b16 %v397
    %v1186 = vunpack.c.h.b16 %v397
    %v1187 = vunpack.c.l.b16 %v398
    %v1188 = vunpack.c.h.b16 %v398
    %v1189 = vunpack.c.l.b16 %v399
    %v1190 = vunpack.c.h.b16 %v399
    %v1191 = vunpack.c.l.b16 %v400
    %v1192 = vunpack.c.h.b16 %v400
    %v1193 = vunpack.c.l.b16 %v401
    %v1194 = vunpack.c.h.b16 %v401
    %v1195 = vunpack.c.l.b16 %v402
    %v1196 = vunpack.c.h.b16 %v402
    %v1197 = vunpack.c.l.b16 %v403
    %v1198 = vunpack.c.h.b16 %v403
    %v1199 = vunpack.c.l.b16 %v404
    %v1200 = vunpack.c.h.b16 %v404
    %v1201 = vunpack.c.l.b16 %v405
    %v1202 = vunpack.c.h.b16 %v405
    %v1203 = vunpack.c.l.b16 %v406
    %v1204 = vunpack.c.h.b16 %v406
    %v1205 = vunpack.c.l.b16 %v407
    %v1206 = vunpack.c.h.b16 %v407
    %v1207 = vunpack.c.l.b16 %v408
    %v1208 = vunpack.c.h.b16 %v408
    %v1209 = vunpack.c.l.b16 %v409
    %v1210 = vunpack.c.h.b16 %v409
    %v1211 = vunpack.c.l.b16 %v410
    %v1212 = vunpack.c.h.b16 %v410
    %v1213 = vunpack.c.l.b16 %v411
    %v1214 = vunpack.c.h.b16 %v411
    %v1215 = vunpack.c.l.b16 %v412
    %v1216 = vunpack.c.h.b16 %v412
    %v1217 = vunpack.c.l.b16 %v413
    %v1218 = vunpack.c.h.b16 %v413
    %v1219 = vunpack.c.l.b16 %v414
    %v1220 = vunpack.c.h.b16 %v414
    %v1221 = vunpack.c.l.b16 %v415
    %v1222 = vunpack.c.h.b16 %v415
    %v1223 = vunpack.c.l.b16 %v416
    %v1224 = vunpack.c.h.b16 %v416
    %v1225 = vunpack.c.l.b16 %v417
    %v1226 = vunpack.c.h.b16 %v417
    %v1227 = vunpack.c.l.b16 %v418
    %v1228 = vunpack.c.h.b16 %v418
    %v1229 = vunpack.c.l.b16 %v419
    %v1230 = vunpack.c.h.b16 %v419
    %v1231 = vunpack.c.l.b16 %v420
    %v1232 = vunpack.c.h.b16 %v420
    %v1233 = vunpack.c.l.b16 %v421
    %v1234 = vunpack.c.h.b16 %v421
    %v1235 = vunpack.c.l.b16 %v422
    %v1236 = vunpack.c.h.b16 %v422
    %v1237 = vunpack.c.l.b16 %v423
    %v1238 = vunpack.c.h.b16 %v423
    %v1239 = vunpack.c.l.b16 %v424
    %v1240 = vunpack.c.h.b16 %v424
    %v1241 = vunpack.c.l.b16 %v425
    %v1242 = vunpack.c.h.b16 %v425
    %v1243 = vunpack.c.l.b16 %v426
    %v1244 = vunpack.c.h.b16 %v426
    %v1245 = vunpack.c.l.b16 %v427
    %v1246 = vunpack.c.h.b16 %v427
    %v1247 = vunpack.c.l.b16 %v428
    %v1248 = vunpack.c.h.b16 %v428
    %v1249 = vunpack.c.l.b16 %v429
    %v1250 = vunpack.c.h.b16 %v429
    %v1251 = vunpack.c.l.b16 %v430
    %v1252 = vunpack.c.h.b16 %v430
    %v1253 = vunpack.c.l.b16 %v431
    %v1254 = vunpack.c.h.b16 %v431
    %v1255 = vunpack.c.l.b16 %v432
    %v1256 = vunpack.c.h.b16 %v432
    %v1257 = vunpack.c.l.b16 %v433
    %v1258 = vunpack.c.h.b16 %v433
    %v1259 = vunpack.c.l.b16 %v434
    %v1260 = vunpack.c.h.b16 %v434
    %v1261 = vunpack.c.l.b16 %v435
    %v1262 = vunpack.c.h.b16 %v435
    %v1263 = vunpack.c.l.b16 %v436
    %v1264 = vunpack.c.h.b16 %v436
    %v1265 = vunpack.c.l.b16 %v437
    %v1266 = vunpack.c.h.b16 %v437
    %v1267 = vunpack.c.l.b16 %v438
    %v1268 = vunpack.c.h.b16 %v438
    %v1269 = vunpack.c.l.b16 %v439
    %v1270 = vunpack.c.h.b16 %v439
    %v1271 = vunpack.c.l.b16 %v440
    %v1272 = vunpack.c.h.b16 %v440
    %v1273 = vunpack.c.l.b16 %v441
    %v1274 = vunpack.c.h.b16 %v441
    %v1275 = vunpack.c.l.b16 %v442
    %v1276 = vunpack.c.h.b16 %v442
    %v1277 = vunpack.c.l.b16 %v443
    %v1278 = vunpack.c.h.b16 %v443
    %v1279 = vunpack.c.l.b16 %v444
    %v1280 = vunpack.c.h.b16 %v444
    %v1281 = vunpack.c.l.b16 %v445
    %v1282 = vunpack.c.h.b16 %v445
    %v1283 = vunpack.c.l.b16 %v446
    %v1284 = vunpack.c.h.b16 %v446
    %v1285 = vunpack.c.l.b16 %v447
    %v1286 = vunpack.c.h.b16 %v447
    %v1287 = vunpack.c.l.b16 %v448
    %v1288 = vunpack.c.h.b16 %v448
    %v1289 = vunpack.c.l.b16 %v449
    %v1290 = vunpack.c.h.b16 %v449
    %v1291 = vunpack.c.l.b16 %v450
    %v1292 = vunpack.c.h.b16 %v450
    %v1293 = vunpack.c.l.b16 %v451
    %v1294 = vunpack.c.h.b16 %v451
    %v1295 = vunpack.c.l.b16 %v452
    %v1296 = vunpack.c.h.b16 %v452
    %v1297 = vunpack.c.l.b16 %v453
    %v1298 = vunpack.c.h.b16 %v453
    %v1299 = vunpack.c.l.b16 %v454
    %v1300 = vunpack.c.h.b16 %v454
    %v1301 = vunpack.c.l.b16 %v455
    %v1302 = vunpack.c.h.b16 %v455
    %v1303 = vunpack.c.l.b16 %v456
    %v1304 = vunpack.c.h.b16 %v456
    %v1305 = vunpack.c.l.b16 %v457
    %v1306 = vunpack.c.h.b16 %v457
    %v1307 = vunpack.c.l.b16 %v458
    %v1308 = vunpack.c.h.b16 %v458
    %v1309 = vunpack.c.l.b16 %v459
    %v1310 = vunpack.c.h.b16 %v459
    %v1311 = vunpack.c.l.b16 %v460
    %v1312 = vunpack.c.h.b16 %v460
    %v1313 = vunpack.c.l.b16 %v461
    %v1314 = vunpack.c.h.b16 %v461
    %v1315 = vunpack.c.l.b16 %v462
    %v1316 = vunpack.c.h.b16 %v462
    %v1317 = vunpack.c.l.b16 %v463
    %v1318 = vunpack.c.h.b16 %v463
    %v1319 = vunpack.c.l.b16 %v464
    %v1320 = vunpack.c.h.b16 %v464
    %v1321 = vunpack.c.l.b16 %v465
    %v1322 = vunpack.c.h.b16 %v465
    %v1323 = vunpack.c.l.b16 %v466
    %v1324 = vunpack.c.h.b16 %v466
    %v1325 = vunpack.c.l.b16 %v467
    %v1326 = vunpack.c.h.b16 %v467
    %v1327 = vunpack.c.l.b16 %v468
    %v1328 = vunpack.c.h.b16 %v468
    %v1329 = vunpack.c.l.b16 %v469
    %v1330 = vunpack.c.h.b16 %v469
    %v1331 = vunpack.c.l.b16 %v470
    %v1332 = vunpack.c.h.b16 %v470
    %v1333 = vunpack.c.l.b16 %v471
    %v1334 = vunpack.c.h.b16 %v471
    %v1335 = vunpack.c.l.b16 %v472
    %v1336 = vunpack.c.h.b16 %v472
    %v1337 = vunpack.c.l.b16 %v473
    %v1338 = vunpack.c.h.b16 %v473
    %v1339 = vunpack.c.l.b16 %v474
    %v1340 = vunpack.c.h.b16 %v474
    %v1341 = vunpack.c.l.b16 %v475
    %v1342 = vunpack.c.h.b16 %v475
    %v1343 = vunpack.c.l.b16 %v476
    %v1344 = vunpack.c.h.b16 %v476
    %v1345 = vunpack.c.l.b16 %v477
    %v1346 = vunpack.c.h.b16 %v477
    %v1347 = vunpack.c.l.b16 %v478
    %v1348 = vunpack.c.h.b16 %v478
    %v1349 = vunpack.c.l.b16 %v479
    %v1350 = vunpack.c.h.b16 %v479
    %v1351 = vunpack.c.l.b16 %v480
    %v1352 = vunpack.c.h.b16 %v480
    %v1353 = vunpack.c.l.b16 %v481
    %v1354 = vunpack.c.h.b16 %v481
    %v1355 = vunpack.c.l.b16 %v482
    %v1356 = vunpack.c.h.b16 %v482
    %v1357 = vunpack.c.l.b16 %v483
    %v1358 = vunpack.c.h.b16 %v483
    %v1359 = vunpack.c.l.b16 %v484
    %v1360 = vunpack.c.h.b16 %v484
    %v1361 = vunpack.c.l.b16 %v485
    %v1362 = vunpack.c.h.b16 %v485
    %v1363 = vunpack.c.l.b16 %v486
    %v1364 = vunpack.c.h.b16 %v486
    %v1365 = vunpack.c.l.b16 %v487
    %v1366 = vunpack.c.h.b16 %v487
    %v1367 = vunpack.c.l.b16 %v488
    %v1368 = vunpack.c.h.b16 %v488
    %v1369 = vunpack.c.l.b16 %v489
    %v1370 = vunpack.c.h.b16 %v489
    %v1371 = vunpack.c.l.b16 %v490
    %v1372 = vunpack.c.h.b16 %v490
    %v1373 = vunpack.c.l.b16 %v491
    %v1374 = vunpack.c.h.b16 %v491
    %v1375 = vunpack.c.l.b16 %v492
    %v1376 = vunpack.c.h.b16 %v492
    %v1377 = vunpack.c.l.b16 %v493
    %v1378 = vunpack.c.h.b16 %v493
    %v1379 = vunpack.c.l.b16 %v494
    %v1380 = vunpack.c.h.b16 %v494
    %v1381 = vunpack.c.l.b16 %v495
    %v1382 = vunpack.c.h.b16 %v495
    %v1383 = vunpack.c.l.b16 %v496
    %v1384 = vunpack.c.h.b16 %v496
    %v1385 = vunpack.c.l.b16 %v497
    %v1386 = vunpack.c.h.b16 %v497
    %v1387 = vunpack.c.l.b16 %v498
    %v1388 = vunpack.c.h.b16 %v498
    %v1389 = vunpack.c.l.b16 %v499
    %v1390 = vunpack.c.h.b16 %v499
    %v1391 = vunpack.c.l.b16 %v500
    %v1392 = vunpack.c.h.b16 %v500
    %v1393 = vunpack.c.l.b16 %v501
    %v1394 = vunpack.c.h.b16 %v501
    %v1395 = vunpack.c.l.b16 %v502
    %v1396 = vunpack.c.h.b16 %v502
    %v1397 = vunpack.c.l.b16 %v503
    %v1398 = vunpack.c.h.b16 %v503
    %v1399 = vunpack.c.l.b16 %v504
    %v1400 = vunpack.c.h.b16 %v504
    %v1401 = vpack.c.b16 %v831, %v825
    %v1402 = vpack.c.b16 %v832, %v826
    %v1403 = vpack.c.b16 %v833, %v827
    %v1404 = vpack.c.b16 %v834, %v828
    %v1405 = vpack.c.b16 %v835, %v829
    %v1406 = vpack.c.b16 %v836, %v830
    %v1407 = vpack.c.b16 %v843, %v837
    %v1408 = vpack.c.b16 %v844, %v838
    %v1409 = vpack.c.b16 %v845, %v839
    %v1410 = vpack.c.b16 %v846, %v840
    %v1411 = vpack.c.b16 %v847, %v841
    %v1412 = vpack.c.b16 %v848, %v842
    %v1413 = vpack.c.b16 %v855, %v849
    %v1414 = vpack.c.b16 %v856, %v850
    %v1415 = vpack.c.b16 %v857, %v851
    %v1416 = vpack.c.b16 %v858, %v852
    %v1417 = vpack.c.b16 %v859, %v853
    %v1418 = vpack.c.b16 %v860, %v854
    %v1419 = vpack.c.b16 %v867, %v861
    %v1420 = vpack.c.b16 %v868, %v862
    %v1421 = vpack.c.b16 %v869, %v863
    %v1422 = vpack.c.b16 %v870, %v864
    %v1423 = vpack.c.b16 %v871, %v865
    %v1424 = vpack.c.b16 %v872, %v866
    %v1425 = vpack.c.b16 %v879, %v873
    %v1426 = vpack.c.b16 %v880, %v874
    %v1427 = vpack.c.b16 %v881, %v875
    %v1428 = vpack.c.b16 %v882, %v876
    %v1429 = vpack.c.b16 %v883, %v877
    %v1430 = vpack.c.b16 %v884, %v878
    %v1431 = vpack.c.b16 %v891, %v885
    %v1432 = vpack.c.b16 %v892, %v886
    %v1433 = vpack.c.b16 %v893, %v887
    %v1434 = vpack.c.b16 %v894, %v888
    %v1435 = vpack.c.b16 %v895, %v889
    %v1436 = vpack.c.b16 %v896, %v890
    %v1437 = vpack.c.b16 %v903, %v897
    %v1438 = vpack.c.b16 %v904, %v898
    %v1439 = vpack.c.b16 %v905, %v899
    %v1440 = vpack.c.b16 %v906, %v900
    %v1441 = vpack.c.b16 %v907, %v901
    %v1442 = vpack.c.b16 %v908, %v902
    %v1443 = vpack.c.b16 %v915, %v909
    %v1444 = vpack.c.b16 %v916, %v910
    %v1445 = vpack.c.b16 %v917, %v911
    %v1446 = vpack.c.b16 %v918, %v912
    %v1447 = vpack.c.b16 %v919, %v913
    %v1448 = vpack.c.b16 %v920, %v914
    %v1449 = vpack.c.b16 %v927, %v921
    %v1450 = vpack.c.b16 %v928, %v922
    %v1451 = vpack.c.b16 %v929, %v923
    %v1452 = vpack.c.b16 %v930, %v924
    %v1453 = vpack.c.b16 %v931, %v925
    %v1454 = vpack.c.b16 %v932, %v926
    %v1455 = vpack.c.b16 %v939, %v933
    %v1456 = vpack.c.b16 %v940, %v934
    %v1457 = vpack.c.b16 %v941, %v935
    %v1458 = vpack.c.b16 %v942, %v936
    %v1459 = vpack.c.b16 %v943, %v937
    %v1460 = vpack.c.b16 %v944, %v938
    %v1461 = vpack.c.b16 %v951, %v945
    %v1462 = vpack.c.b16 %v952, %v946
    %v1463 = vpack.c.b16 %v953, %v947
    %v1464 = vpack.c.b16 %v954, %v948
    %v1465 = vpack.c.b16 %v955, %v949
    %v1466 = vpack.c.b16 %v956, %v950
    %v1467 = vpack.c.b16 %v963, %v957
    %v1468 = vpack.c.b16 %v964, %v958
    %v1469 = vpack.c.b16 %v965, %v959
    %v1470 = vpack.c.b16 %v966, %v960
    %v1471 = vpack.c.b16 %v967, %v961
    %v1472 = vpack.c.b16 %v968, %v962
    %v1473 = vpack.c.b16 %v975, %v969
    %v1474 = vpack.c.b16 %v976, %v970
    %v1475 = vpack.c.b16 %v977, %v971
    %v1476 = vpack.c.b16 %v978, %v972
    %v1477 = vpack.c.b16 %v979, %v973
    %v1478 = vpack.c.b16 %v980, %v974
    %v1479 = vpack.c.b16 %v987, %v981
    %v1480 = vpack.c.b16 %v988, %v982
    %v1481 = vpack.c.b16 %v989, %v983
    %v1482 = vpack.c.b16 %v990, %v984
    %v1483 = vpack.c.b16 %v991, %v985
    %v1484 = vpack.c.b16 %v992, %v986
    %v1485 = vpack.c.b16 %v999, %v993
    %v1486 = vpack.c.b16 %v1000, %v994
    %v1487 = vpack.c.b16 %v1001, %v995
    %v1488 = vpack.c.b16 %v1002, %v996
    %v1489 = vpack.c.b16 %v1003, %v997
    %v1490 = vpack.c.b16 %v1004, %v998
    %v1491 = vpack.c.b16 %v1011, %v1005
    %v1492 = vpack.c.b16 %v1012, %v1006
    %v1493 = vpack.c.b16 %v1013, %v1007
    %v1494 = vpack.c.b16 %v1014, %v1008
    %v1495 = vpack.c.b16 %v1015, %v1009
    %v1496 = vpack.c.b16 %v1016, %v1010
    %v1497 = vpack.c.b16 %v1023, %v1017
    %v1498 = vpack.c.b16 %v1024, %v1018
    %v1499 = vpack.c.b16 %v1025, %v1019
    %v1500 = vpack.c.b16 %v1026, %v1020
    %v1501 = vpack.c.b16 %v1027, %v1021
    %v1502 = vpack.c.b16 %v1028, %v1022
    %v1503 = vpack.c.b16 %v1035, %v1029
    %v1504 = vpack.c.b16 %v1036, %v1030
    %v1505 = vpack.c.b16 %v1037, %v1031
    %v1506 = vpack.c.b16 %v1038, %v1032
    %v1507 = vpack.c.b16 %v1039, %v1033
    %v1508 = vpack.c.b16 %v1040, %v1034
    %v1509 = vpack.c.b16 %v1047, %v1041
    %v1510 = vpack.c.b16 %v1048, %v1042
    %v1511 = vpack.c.b16 %v1049, %v1043
    %v1512 = vpack.c.b16 %v1050, %v1044
    %v1513 = vpack.c.b16 %v1051, %v1045
    %v1514 = vpack.c.b16 %v1052, %v1046
    %v1515 = vpack.c.b16 %v1059, %v1053
    %v1516 = vpack.c.b16 %v1060, %v1054
    %v1517 = vpack.c.b16 %v1061, %v1055
    %v1518 = vpack.c.b16 %v1062, %v1056
    %v1519 = vpack.c.b16 %v1063, %v1057
    %v1520 = vpack.c.b16 %v1064, %v1058
    %v1521 = vpack.c.b16 %v1071, %v1065
    %v1522 = vpack.c.b16 %v1072, %v1066
    %v1523 = vpack.c.b16 %v1073, %v1067
    %v1524 = vpack.c.b16 %v1074, %v1068
    %v1525 = vpack.c.b16 %v1075, %v1069
    %v1526 = vpack.c.b16 %v1076, %v1070
    %v1527 = vpack.c.b16 %v1083, %v1077
    %v1528 = vpack.c.b16 %v1084, %v1078
    %v1529 = vpack.c.b16 %v1085, %v1079
    %v1530 = vpack.c.b16 %v1086, %v1080
    %v1531 = vpack.c.b16 %v1087, %v1081
    %v1532 = vpack.c.b16 %v1088, %v1082
    %v1533 = vpack.c.b16 %v1095, %v1089
    %v1534 = vpack.c.b16 %v1096, %v1090
    %v1535 = vpack.c.b16 %v1097, %v1091
    %v1536 = vpack.c.b16 %v1098, %v1092
    %v1537 = vpack.c.b16 %v1099, %v1093
    %v1538 = vpack.c.b16 %v1100, %v1094
    %v1539 = vpack.c.b16 %v1107, %v1101
    %v1540 = vpack.c.b16 %v1108, %v1102
    %v1541 = vpack.c.b16 %v1109, %v1103
    %v1542 = vpack.c.b16 %v1110, %v1104
    %v1543 = vpack.c.b16 %v1111, %v1105
    %v1544 = vpack.c.b16 %v1112, %v1106
    %v1545 = vpack.c.b16 %v1119, %v1113
    %v1546 = vpack.c.b16 %v1120, %v1114
    %v1547 = vpack.c.b16 %v1121, %v1115
    %v1548 = vpack.c.b16 %v1122, %v1116
    %v1549 = vpack.c.b16 %v1123, %v1117
    %v1550 = vpack.c.b16 %v1124, %v1118
    %v1551 = vpack.c.b16 %v1131, %v1125
    %v1552 = vpack.c.b16 %v1132, %v1126
    %v1553 = vpack.c.b16 %v1133, %v1127
    %v1554 = vpack.c.b16 %v1134, %v1128
    %v1555 = vpack.c.b16 %v1135, %v1129
    %v1556 = vpack.c.b16 %v1136, %v1130
    %v1557 = vpack.c.b16 %v1143, %v1137
    %v1558 = vpack.c.b16 %v1144, %v1138
    %v1559 = vpack.c.b16 %v1145, %v1139
    %v1560 = vpack.c.b16 %v1146, %v1140
    %v1561 = vpack.c.b16 %v1147, %v1141
    %v1562 = vpack.c.b16 %v1148, %v1142
    %v1563 = vpack.c.b16 %v1155, %v1149
    %v1564 = vpack.c.b16 %v1156, %v1150
    %v1565 = vpack.c.b16 %v1157, %v1151
    %v1566 = vpack.c.b16 %v1158, %v1152
    %v1567 = vpack.c.b16 %v1159, %v1153
    %v1568 = vpack.c.b16 %v1160, %v1154
    %v1569 = vpack.c.b16 %v1167, %v1161
    %v1570 = vpack.c.b16 %v1168, %v1162
    %v1571 = vpack.c.b16 %v1169, %v1163
    %v1572 = vpack.c.b16 %v1170, %v1164
    %v1573 = vpack.c.b16 %v1171, %v1165
    %v1574 = vpack.c.b16 %v1172, %v1166
    %v1575 = vpack.c.b16 %v1179, %v1173
    %v1576 = vpack.c.b16 %v1180, %v1174
    %v1577 = vpack.c.b16 %v1181, %v1175
    %v1578 = vpack.c.b16 %v1182, %v1176
    %v1579 = vpack.c.b16 %v1183, %v1177
    %v1580 = vpack.c.b16 %v1184, %v1178
    %v1581 = vpack.c.b16 %v1191, %v1185
    %v1582 = vpack.c.b16 %v1192, %v1186
    %v1583 = vpack.c.b16 %v1193, %v1187
    %v1584 = vpack.c.b16 %v1194, %v1188
    %v1585 = vpack.c.b16 %v1195, %v1189
    %v1586 = vpack.c.b16 %v1196, %v1190
    %v1587 = vpack.c.b16 %v1203, %v1197
    %v1588 = vpack.c.b16 %v1204, %v1198
    %v1589 = vpack.c.b16 %v1205, %v1199
    %v1590 = vpack.c.b16 %v1206, %v1200
    %v1591 = vpack.c.b16 %v1207, %v1201
    %v1592 = vpack.c.b16 %v1208, %v1202
    %v1593 = vpack.c.b16 %v1215, %v1209
    %v1594 = vpack.c.b16 %v1216, %v1210
    %v1595 = vpack.c.b16 %v1217, %v1211
    %v1596 = vpack.c.b16 %v1218, %v1212
    %v1597 = vpack.c.b16 %v1219, %v1213
    %v1598 = vpack.c.b16 %v1220, %v1214
    %v1599 = vpack.c.b16 %v1227, %v1221
    %v1600 = vpack.c.b16 %v1228, %v1222
    %v1601 = vpack.c.b16 %v1229, %v1223
    %v1602 = vpack.c.b16 %v1230, %v1224
    %v1603 = vpack.c.b16 %v1231, %v1225
    %v1604 = vpack.c.b16 %v1232, %v1226
    %v1605 = vpack.c.b16 %v1239, %v1233
    %v1606 = vpack.c.b16 %v1240, %v1234
    %v1607 = vpack.c.b16 %v1241, %v1235
    %v1608 = vpack.c.b16 %v1242, %v1236
    %v1609 = vpack.c.b16 %v1243, %v1237
    %v1610 = vpack.c.b16 %v1244, %v1238
    %v1611 = vpack.c.b16 %v1251, %v1245
    %v1612 = vpack.c.b16 %v1252, %v1246
    %v1613 = vpack.c.b16 %v1253, %v1247
    %v1614 = vpack.c.b16 %v1254, %v1248
    %v1615 = vpack.c.b16 %v1255, %v1249
    %v1616 = vpack.c.b16 %v1256, %v1250
    %v1617 = vpack.c.b16 %v1263, %v1257
    %v1618 = vpack.c.b16 %v1264, %v1258
    %v1619 = vpack.c.b16 %v1265, %v1259
    %v1620 = vpack.c.b16 %v1266, %v1260
    %v1621 = vpack.c.b16 %v1267, %v1261
    %v1622 = vpack.c.b16 %v1268, %v1262
    %v1623 = vpack.c.b16 %v1275, %v1269
    %v1624 = vpack.c.b16 %v1276, %v1270
    %v1625 = vpack.c.b16 %v1277, %v1271
    %v1626 = vpack.c.b16 %v1278, %v1272
    %v1627 = vpack.c.b16 %v1279, %v1273
    %v1628 = vpack.c.b16 %v1280, %v1274
    %v1629 = vpack.c.b16 %v1287, %v1281
    %v1630 = vpack.c.b16 %v1288, %v1282
    %v1631 = vpack.c.b16 %v1289, %v1283
    %v1632 = vpack.c.b16 %v1290, %v1284
    %v1633 = vpack.c.b16 %v1291, %v1285
    %v1634 = vpack.c.b16 %v1292, %v1286
    %v1635 = vpack.c.b16 %v1299, %v1293
    %v1636 = vpack.c.b16 %v1300, %v1294
    %v1637 = vpack.c.b16 %v1301, %v1295
    %v1638 = vpack.c.b16 %v1302, %v1296
    %v1639 = vpack.c.b16 %v1303, %v1297
    %v1640 = vpack.c.b16 %v1304, %v1298
    %v1641 = vpack.c.b16 %v1311, %v1305
    %v1642 = vpack.c.b16 %v1312, %v1306
    %v1643 = vpack.c.b16 %v1313, %v1307
    %v1644 = vpack.c.b16 %v1314, %v1308
    %v1645 = vpack.c.b16 %v1315, %v1309
    %v1646 = vpack.c.b16 %v1316, %v1310
    %v1647 = vpack.c.b16 %v1323, %v1317
    %v1648 = vpack.c.b16 %v1324, %v1318
    %v1649 = vpack.c.b16 %v1325, %v1319
    %v1650 = vpack.c.b16 %v1326, %v1320
    %v1651 = vpack.c.b16 %v1327, %v1321
    %v1652 = vpack.c.b16 %v1328, %v1322
    %v1653 = vpack.c.b16 %v1335, %v1329
    %v1654 = vpack.c.b16 %v1336, %v1330
    %v1655 = vpack.c.b16 %v1337, %v1331
    %v1656 = vpack.c.b16 %v1338, %v1332
    %v1657 = vpack.c.b16 %v1339, %v1333
    %v1658 = vpack.c.b16 %v1340, %v1334
    %v1659 = vpack.c.b16 %v1347, %v1341
    %v1660 = vpack.c.b16 %v1348, %v1342
    %v1661 = vpack.c.b16 %v1349, %v1343
    %v1662 = vpack.c.b16 %v1350, %v1344
    %v1663 = vpack.c.b16 %v1351, %v1345
    %v1664 = vpack.c.b16 %v1352, %v1346
    %v1665 = vpack.c.b16 %v1359, %v1353
    %v1666 = vpack.c.b16 %v1360, %v1354
    %v1667 = vpack.c.b16 %v1361, %v1355
    %v1668 = vpack.c.b16 %v1362, %v1356
    %v1669 = vpack.c.b16 %v1363, %v1357
    %v1670 = vpack.c.b16 %v1364, %v1358
    %v1671 = vpack.c.b16 %v1371, %v1365
    %v1672 = vpack.c.b16 %v1372, %v1366
    %v1673 = vpack.c.b16 %v1373, %v1367
    %v1674 = vpack.c.b16 %v1374, %v1368
    %v1675 = vpack.c.b16 %v1375, %v1369
    %v1676 = vpack.c.b16 %v1376, %v1370
    %v1677 = vpack.c.b16 %v1383, %v1377
    %v1678 = vpack.c.b16 %v1384, %v1378
    %v1679 = vpack.c.b16 %v1385, %v1379
    %v1680 = vpack.c.b16 %v1386, %v1380
    %v1681 = vpack.c.b16 %v1387, %v1381
    %v1682 = vpack.c.b16 %v1388, %v1382
    %v1683 = vpack.c.b16 %v1395, %v1389
    %v1684 = vpack.c.b16 %v1396, %v1390
    %v1685 = vpack.c.b16 %v1397, %v1391
    %v1686 = vpack.c.b16 %v1398, %v1392
    %v1687 = vpack.c.b16 %v1399, %v1393
    %v1688 = vpack.c.b16 %v1400, %v1394
    %1977 = vmatprep.subr.bf16.mxu0 %v1402
    %1978 = vmatpush1.bf16.msra.mxu0 %v1401
    %1979 = vmatprep.subr.bf16.mxu0 %v1408
    %1980 = vmatpush1.bf16.msra.mxu0 %v1407
    %1981 = vmatprep.subr.bf16.mxu0 %v1414
    %1982 = vmatpush1.bf16.msra.mxu0 %v1413
    %1983 = vmatprep.subr.bf16.mxu0 %v1420
    %1984 = vmatpush1.bf16.msra.mxu0 %v1419
    %1985 = vmatprep.subr.bf16.mxu0 %v1426
    %1986 = vmatpush1.bf16.msra.mxu0 %v1425
    %1987 = vmatprep.subr.bf16.mxu0 %v1432
    %1988 = vmatpush1.bf16.msra.mxu0 %v1431
    %1989 = vmatprep.subr.bf16.mxu0 %v1438
    %1990 = vmatpush1.bf16.msra.mxu0 %v1437
    %1991 = vmatprep.subr.bf16.mxu0 %v1444
    %1992 = vmatpush1.bf16.msra.mxu0 %v1443
    %1993 = vmatprep.subr.bf16.mxu0 %v1450
    %1994 = vmatpush1.bf16.msra.mxu0 %v1449
    %1995 = vmatprep.subr.bf16.mxu0 %v1456
    %1996 = vmatpush1.bf16.msra.mxu0 %v1455
    %1997 = vmatprep.subr.bf16.mxu0 %v1462
    %1998 = vmatpush1.bf16.msra.mxu0 %v1461
    %1999 = vmatprep.subr.bf16.mxu0 %v1468
    %2000 = vmatpush1.bf16.msra.mxu0 %v1467
    %2001 = vmatprep.subr.bf16.mxu0 %v1474
    %2002 = vmatpush1.bf16.msra.mxu0 %v1473
    %2003 = vmatprep.subr.bf16.mxu0 %v1480
    %2004 = vmatpush1.bf16.msra.mxu0 %v1479
    %2005 = vmatprep.subr.bf16.mxu0 %v1486
    %2006 = vmatpush1.bf16.msra.mxu0 %v1485
    %2007 = vmatprep.subr.bf16.mxu0 %v1492
    %2008 = vmatpush1.bf16.msra.mxu0 %v1491
    %2009 = vmatprep.mubr.bf16.mxu0 %v170
    %2010 = vmatmul.mubr.bf16.gmra.mrb[0].mxu0 %v169
    %v2011 = vpop.f32.mrb[0].mxu0
    %v2012 = vadd.f32 %v510, %v2011
    %v2013 = vpop.f32.mrb[0].mxu0
    %v2014 = vadd.f32 %v514, %v2013
    %v2015 = vpop.f32.mrb[0].mxu0
    %v2016 = vadd.f32 %v510, %v2015
    %v2017 = vpop.f32.mrb[0].mxu0
    %v2018 = vadd.f32 %v514, %v2017
    %2019 = vmatprep.mubr.bf16.mxu0 %v176
    %2020 = vmatmul.mubr.bf16.gmra.mrb[0].mxu0 %v175
    %v2021 = vpop.f32.mrb[0].mxu0
    %v2022 = vadd.f32 %v510, %v2021
    %v2023 = vpop.f32.mrb[0].mxu0
    %v2024 = vadd.f32 %v514, %v2023
    %v2025 = vpop.f32.mrb[0].mxu0
    %v2026 = vadd.f32 %v510, %v2025
    %v2027 = vpop.f32.mrb[0].mxu0
    %v2028 = vadd.f32 %v514, %v2027
    %2029 = vmatprep.mubr.bf16.mxu0 %v182
    %2030 = vmatmul.mubr.bf16.gmra.mrb[0].mxu0 %v181
    %v2031 = vpop.f32.mrb[0].mxu0
    %v2032 = vadd.f32 %v510, %v2031
    %v2033 = vpop.f32.mrb[0].mxu0
    %v2034 = vadd.f32 %v514, %v2033
    %v2035 = vpop.f32.mrb[0].mxu0
    %v2036 = vadd.f32 %v510, %v2035
    %v2037 = vpop.f32.mrb[0].mxu0
    %v2038 = vadd.f32 %v514, %v2037
    %2039 = vmatprep.mubr.bf16.mxu0 %v188
    %2040 = vmatmul.mubr.bf16.gmra.mrb[0].mxu0 %v187
    %v2041 = vpop.f32.mrb[0].mxu0
    %v2042 = vadd.f32 %v510, %v2041
    %v2043 = vpop.f32.mrb[0].mxu0
    %v2044 = vadd.f32 %v514, %v2043
    %v2045 = vpop.f32.mrb[0].mxu0
    %v2046 = vadd.f32 %v510, %v2045
    %v2047 = vpop.f32.mrb[0].mxu0
    %v2048 = vadd.f32 %v514, %v2047
    %2049 = vmatprep.mubr.bf16.mxu0 %v194
    %2050 = vmatmul.mubr.bf16.gmra.mrb[0].mxu0 %v193
    %v2051 = vpop.f32.mrb[0].mxu0
    %v2052 = vadd.f32 %v510, %v2051
    %v2053 = vpop.f32.mrb[0].mxu0
    %v2054 = vadd.f32 %v514, %v2053
    %v2055 = vpop.f32.mrb[0].mxu0
    %v2056 = vadd.f32 %v510, %v2055
    %v2057 = vpop.f32.mrb[0].mxu0
    %v2058 = vadd.f32 %v514, %v2057
    %2059 = vmatprep.mubr.bf16.mxu0 %v200
    %2060 = vmatmul.mubr.bf16.gmra.mrb[0].mxu0 %v199
    %v2061 = vpop.f32.mrb[0].mxu0
    %v2062 = vadd.f32 %v510, %v2061
    %v2063 = vpop.f32.mrb[0].mxu0
    %v2064 = vadd.f32 %v514, %v2063
    %v2065 = vpop.f32.mrb[0].mxu0
    %v2066 = vadd.f32 %v510, %v2065
    %v2067 = vpop.f32.mrb[0].mxu0
    %v2068 = vadd.f32 %v514, %v2067
    %2069 = vmatprep.mubr.bf16.mxu0 %v206
    %2070 = vmatmul.mubr.bf16.gmra.mrb[0].mxu0 %v205
    %v2071 = vpop.f32.mrb[0].mxu0
    %v2072 = vadd.f32 %v510, %v2071
    %v2073 = vpop.f32.mrb[0].mxu0
    %v2074 = vadd.f32 %v514, %v2073
    %v2075 = vpop.f32.mrb[0].mxu0
    %v2076 = vadd.f32 %v510, %v2075
    %v2077 = vpop.f32.mrb[0].mxu0
    %v2078 = vadd.f32 %v514, %v2077
    %2079 = vmatprep.mubr.bf16.mxu0 %v212
    %2080 = vmatmul.mubr.bf16.gmra.mrb[0].mxu0 %v211
    %v2081 = vpop.f32.mrb[0].mxu0
    %v2082 = vadd.f32 %v510, %v2081
    %v2083 = vpop.f32.mrb[0].mxu0
    %v2084 = vadd.f32 %v514, %v2083
    %v2085 = vpop.f32.mrb[0].mxu0
    %v2086 = vadd.f32 %v510, %v2085
    %v2087 = vpop.f32.mrb[0].mxu0
    %v2088 = vadd.f32 %v514, %v2087
    %2089 = vdwg.mxu0
    %2090 = vmatprep.subr.bf16.mxu0 %v1498
    %2091 = vmatpush1.bf16.msra.mxu0 %v1497
    %2092 = vmatprep.subr.bf16.mxu0 %v1504
    %2093 = vmatpush1.bf16.msra.mxu0 %v1503
    %2094 = vmatprep.subr.bf16.mxu0 %v1510
    %2095 = vmatpush1.bf16.msra.mxu0 %v1509
    %2096 = vmatprep.subr.bf16.mxu0 %v1516
    %2097 = vmatpush1.bf16.msra.mxu0 %v1515
    %2098 = vmatprep.subr.bf16.mxu0 %v1522
    %2099 = vmatpush1.bf16.msra.mxu0 %v1521
    %2100 = vmatprep.subr.bf16.mxu0 %v1528
    %2101 = vmatpush1.bf16.msra.mxu0 %v1527
    %2102 = vmatprep.subr.bf16.mxu0 %v1534
    %2103 = vmatpush1.bf16.msra.mxu0 %v1533
    %2104 = vmatprep.subr.bf16.mxu0 %v1540
    %2105 = vmatpush1.bf16.msra.mxu0 %v1539
    %2106 = vmatprep.subr.bf16.mxu0 %v1546
    %2107 = vmatpush1.bf16.msra.mxu0 %v1545
    %2108 = vmatprep.subr.bf16.mxu0 %v1552
    %2109 = vmatpush1.bf16.msra.mxu0 %v1551
    %2110 = vmatprep.subr.bf16.mxu0 %v1558
    %2111 = vmatpush1.bf16.msra.mxu0 %v1557
    %2112 = vmatprep.subr.bf16.mxu0 %v1564
    %2113 = vmatpush1.bf16.msra.mxu0 %v1563
    %2114 = vmatprep.subr.bf16.mxu0 %v1570
    %2115 = vmatpush1.bf16.msra.mxu0 %v1569
    %2116 = vmatprep.subr.bf16.mxu0 %v1576
    %2117 = vmatpush1.bf16.msra.mxu0 %v1575
    %2118 = vmatprep.subr.bf16.mxu0 %v1582
    %2119 = vmatpush1.bf16.msra.mxu0 %v1581
    %2120 = vmatprep.subr.bf16.mxu0 %v1588
    %2121 = vmatpush1.bf16.msra.mxu0 %v1587
    %2122 = vmatprep.mubr.bf16.mxu0 %v172
    %2123 = vmatmul.mubr.bf16.gmra.mrb[0].mxu0 %v171
    %v2124 = vpop.f32.mrb[0].mxu0
    %v2125 = vadd.f32 %v2012, %v2124
    %v2126 = vpop.f32.mrb[0].mxu0
    %v2127 = vadd.f32 %v2014, %v2126
    %v2128 = vpop.f32.mrb[0].mxu0
    %v2129 = vadd.f32 %v2016, %v2128
    %v2130 = vpop.f32.mrb[0].mxu0
    %v2131 = vadd.f32 %v2018, %v2130
    %2132 = vmatprep.mubr.bf16.mxu0 %v178
    %2133 = vmatmul.mubr.bf16.gmra.mrb[0].mxu0 %v177
    %v2134 = vpop.f32.mrb[0].mxu0
    %v2135 = vadd.f32 %v2022, %v2134
    %v2136 = vpop.f32.mrb[0].mxu0
    %v2137 = vadd.f32 %v2024, %v2136
    %v2138 = vpop.f32.mrb[0].mxu0
    %v2139 = vadd.f32 %v2026, %v2138
    %v2140 = vpop.f32.mrb[0].mxu0
    %v2141 = vadd.f32 %v2028, %v2140
    %2142 = vmatprep.mubr.bf16.mxu0 %v184
    %2143 = vmatmul.mubr.bf16.gmra.mrb[0].mxu0 %v183
    %v2144 = vpop.f32.mrb[0].mxu0
    %v2145 = vadd.f32 %v2032, %v2144
    %v2146 = vpop.f32.mrb[0].mxu0
    %v2147 = vadd.f32 %v2034, %v2146
    %v2148 = vpop.f32.mrb[0].mxu0
    %v2149 = vadd.f32 %v2036, %v2148
    %v2150 = vpop.f32.mrb[0].mxu0
    %v2151 = vadd.f32 %v2038, %v2150
    %2152 = vmatprep.mubr.bf16.mxu0 %v190
    %2153 = vmatmul.mubr.bf16.gmra.mrb[0].mxu0 %v189
    %v2154 = vpop.f32.mrb[0].mxu0
    %v2155 = vadd.f32 %v2042, %v2154
    %v2156 = vpop.f32.mrb[0].mxu0
    %v2157 = vadd.f32 %v2044, %v2156
    %v2158 = vpop.f32.mrb[0].mxu0
    %v2159 = vadd.f32 %v2046, %v2158
    %v2160 = vpop.f32.mrb[0].mxu0
    %v2161 = vadd.f32 %v2048, %v2160
    %2162 = vmatprep.mubr.bf16.mxu0 %v196
    %2163 = vmatmul.mubr.bf16.gmra.mrb[0].mxu0 %v195
    %v2164 = vpop.f32.mrb[0].mxu0
    %v2165 = vadd.f32 %v2052, %v2164
    %v2166 = vpop.f32.mrb[0].mxu0
    %v2167 = vadd.f32 %v2054, %v2166
    %v2168 = vpop.f32.mrb[0].mxu0
    %v2169 = vadd.f32 %v2056, %v2168
    %v2170 = vpop.f32.mrb[0].mxu0
    %v2171 = vadd.f32 %v2058, %v2170
    %2172 = vmatprep.mubr.bf16.mxu0 %v202
    %2173 = vmatmul.mubr.bf16.gmra.mrb[0].mxu0 %v201
    %v2174 = vpop.f32.mrb[0].mxu0
    %v2175 = vadd.f32 %v2062, %v2174
    %v2176 = vpop.f32.mrb[0].mxu0
    %v2177 = vadd.f32 %v2064, %v2176
    %v2178 = vpop.f32.mrb[0].mxu0
    %v2179 = vadd.f32 %v2066, %v2178
    %v2180 = vpop.f32.mrb[0].mxu0
    %v2181 = vadd.f32 %v2068, %v2180
    %2182 = vmatprep.mubr.bf16.mxu0 %v208
    %2183 = vmatmul.mubr.bf16.gmra.mrb[0].mxu0 %v207
    %v2184 = vpop.f32.mrb[0].mxu0
    %v2185 = vadd.f32 %v2072, %v2184
    %v2186 = vpop.f32.mrb[0].mxu0
    %v2187 = vadd.f32 %v2074, %v2186
    %v2188 = vpop.f32.mrb[0].mxu0
    %v2189 = vadd.f32 %v2076, %v2188
    %v2190 = vpop.f32.mrb[0].mxu0
    %v2191 = vadd.f32 %v2078, %v2190
    %2192 = vmatprep.mubr.bf16.mxu0 %v214
    %2193 = vmatmul.mubr.bf16.gmra.mrb[0].mxu0 %v213
    %v2194 = vpop.f32.mrb[0].mxu0
    %v2195 = vadd.f32 %v2082, %v2194
    %v2196 = vpop.f32.mrb[0].mxu0
    %v2197 = vadd.f32 %v2084, %v2196
    %v2198 = vpop.f32.mrb[0].mxu0
    %v2199 = vadd.f32 %v2086, %v2198
    %v2200 = vpop.f32.mrb[0].mxu0
    %v2201 = vadd.f32 %v2088, %v2200
    %2202 = vdwg.mxu0
    %2203 = vmatprep.subr.bf16.mxu0 %v1594
    %2204 = vmatpush1.bf16.msra.mxu0 %v1593
    %2205 = vmatprep.subr.bf16.mxu0 %v1600
    %2206 = vmatpush1.bf16.msra.mxu0 %v1599
    %2207 = vmatprep.subr.bf16.mxu0 %v1606
    %2208 = vmatpush1.bf16.msra.mxu0 %v1605
    %2209 = vmatprep.subr.bf16.mxu0 %v1612
    %2210 = vmatpush1.bf16.msra.mxu0 %v1611
    %2211 = vmatprep.subr.bf16.mxu0 %v1618
    %2212 = vmatpush1.bf16.msra.mxu0 %v1617
    %2213 = vmatprep.subr.bf16.mxu0 %v1624
    %2214 = vmatpush1.bf16.msra.mxu0 %v1623
    %2215 = vmatprep.subr.bf16.mxu0 %v1630
    %2216 = vmatpush1.bf16.msra.mxu0 %v1629
    %2217 = vmatprep.subr.bf16.mxu0 %v1636
    %2218 = vmatpush1.bf16.msra.mxu0 %v1635
    %2219 = vmatprep.subr.bf16.mxu0 %v1642
    %2220 = vmatpush1.bf16.msra.mxu0 %v1641
    %2221 = vmatprep.subr.bf16.mxu0 %v1648
    %2222 = vmatpush1.bf16.msra.mxu0 %v1647
    %2223 = vmatprep.subr.bf16.mxu0 %v1654
    %2224 = vmatpush1.bf16.msra.mxu0 %v1653
    %2225 = vmatprep.subr.bf16.mxu0 %v1660
    %2226 = vmatpush1.bf16.msra.mxu0 %v1659
    %2227 = vmatprep.subr.bf16.mxu0 %v1666
    %2228 = vmatpush1.bf16.msra.mxu0 %v1665
    %2229 = vmatprep.subr.bf16.mxu0 %v1672
    %2230 = vmatpush1.bf16.msra.mxu0 %v1671
    %2231 = vmatprep.subr.bf16.mxu0 %v1678
    %2232 = vmatpush1.bf16.msra.mxu0 %v1677
    %2233 = vmatprep.subr.bf16.mxu0 %v1684
    %2234 = vmatpush1.bf16.msra.mxu0 %v1683
    %2235 = vmatprep.mubr.bf16.mxu0 %v174
    %2236 = vmatmul.mubr.bf16.gmra.mrb[0].mxu0 %v173
    %v2237 = vpop.f32.mrb[0].mxu0
    %v2238 = vadd.f32 %v2125, %v2237
    %v2239 = vpop.f32.mrb[0].mxu0
    %v2240 = vadd.f32 %v2127, %v2239
    %v2241 = vpop.f32.mrb[0].mxu0
    %v2242 = vadd.f32 %v2129, %v2241
    %v2243 = vpop.f32.mrb[0].mxu0
    %v2244 = vadd.f32 %v2131, %v2243
    %2245 = vmatprep.mubr.bf16.mxu0 %v180
    %2246 = vmatmul.mubr.bf16.gmra.mrb[0].mxu0 %v179
    %v2247 = vpop.f32.mrb[0].mxu0
    %v2248 = vadd.f32 %v2135, %v2247
    %v2249 = vpop.f32.mrb[0].mxu0
    %v2250 = vadd.f32 %v2137, %v2249
    %v2251 = vpop.f32.mrb[0].mxu0
    %v2252 = vadd.f32 %v2139, %v2251
    %v2253 = vpop.f32.mrb[0].mxu0
    %v2254 = vadd.f32 %v2141, %v2253
    %2255 = vmatprep.mubr.bf16.mxu0 %v186
    %2256 = vmatmul.mubr.bf16.gmra.mrb[0].mxu0 %v185
    %v2257 = vpop.f32.mrb[0].mxu0
    %v2258 = vadd.f32 %v2145, %v2257
    %v2259 = vpop.f32.mrb[0].mxu0
    %v2260 = vadd.f32 %v2147, %v2259
    %v2261 = vpop.f32.mrb[0].mxu0
    %v2262 = vadd.f32 %v2149, %v2261
    %v2263 = vpop.f32.mrb[0].mxu0
    %v2264 = vadd.f32 %v2151, %v2263
    %2265 = vmatprep.mubr.bf16.mxu0 %v192
    %2266 = vmatmul.mubr.bf16.gmra.mrb[0].mxu0 %v191
    %v2267 = vpop.f32.mrb[0].mxu0
    %v2268 = vadd.f32 %v2155, %v2267
    %v2269 = vpop.f32.mrb[0].mxu0
    %v2270 = vadd.f32 %v2157, %v2269
    %v2271 = vpop.f32.mrb[0].mxu0
    %v2272 = vadd.f32 %v2159, %v2271
    %v2273 = vpop.f32.mrb[0].mxu0
    %v2274 = vadd.f32 %v2161, %v2273
    %2275 = vmatprep.mubr.bf16.mxu0 %v198
    %2276 = vmatmul.mubr.bf16.gmra.mrb[0].mxu0 %v197
    %v2277 = vpop.f32.mrb[0].mxu0
    %v2278 = vadd.f32 %v2165, %v2277
    %v2279 = vpop.f32.mrb[0].mxu0
    %v2280 = vadd.f32 %v2167, %v2279
    %v2281 = vpop.f32.mrb[0].mxu0
    %v2282 = vadd.f32 %v2169, %v2281
    %v2283 = vpop.f32.mrb[0].mxu0
    %v2284 = vadd.f32 %v2171, %v2283
    %2285 = vmatprep.mubr.bf16.mxu0 %v204
    %2286 = vmatmul.mubr.bf16.gmra.mrb[0].mxu0 %v203
    %v2287 = vpop.f32.mrb[0].mxu0
    %v2288 = vadd.f32 %v2175, %v2287
    %v2289 = vpop.f32.mrb[0].mxu0
    %v2290 = vadd.f32 %v2177, %v2289
    %v2291 = vpop.f32.mrb[0].mxu0
    %v2292 = vadd.f32 %v2179, %v2291
    %v2293 = vpop.f32.mrb[0].mxu0
    %v2294 = vadd.f32 %v2181, %v2293
    %2295 = vmatprep.mubr.bf16.mxu0 %v210
    %2296 = vmatmul.mubr.bf16.gmra.mrb[0].mxu0 %v209
    %v2297 = vpop.f32.mrb[0].mxu0
    %v2298 = vadd.f32 %v2185, %v2297
    %v2299 = vpop.f32.mrb[0].mxu0
    %v2300 = vadd.f32 %v2187, %v2299
    %v2301 = vpop.f32.mrb[0].mxu0
    %v2302 = vadd.f32 %v2189, %v2301
    %v2303 = vpop.f32.mrb[0].mxu0
    %v2304 = vadd.f32 %v2191, %v2303
    %2305 = vmatprep.mubr.bf16.mxu0 %v216
    %2306 = vmatmul.mubr.bf16.gmra.mrb[0].mxu0 %v215
    %v2307 = vpop.f32.mrb[0].mxu0
    %v2308 = vadd.f32 %v2195, %v2307
    %v2309 = vpop.f32.mrb[0].mxu0
    %v2310 = vadd.f32 %v2197, %v2309
    %v2311 = vpop.f32.mrb[0].mxu0
    %v2312 = vadd.f32 %v2199, %v2311
    %v2313 = vpop.f32.mrb[0].mxu0
    %v2314 = vadd.f32 %v2201, %v2313
    %2315 = vdwg.mxu0
    %2316 = vmatprep.subr.bf16.mxu0 %v1404
    %2317 = vmatpush1.bf16.msra.mxu0 %v1403
    %2318 = vmatprep.subr.bf16.mxu0 %v1410
    %2319 = vmatpush1.bf16.msra.mxu0 %v1409
    %2320 = vmatprep.subr.bf16.mxu0 %v1416
    %2321 = vmatpush1.bf16.msra.mxu0 %v1415
    %2322 = vmatprep.subr.bf16.mxu0 %v1422
    %2323 = vmatpush1.bf16.msra.mxu0 %v1421
    %2324 = vmatprep.subr.bf16.mxu0 %v1428
    %2325 = vmatpush1.bf16.msra.mxu0 %v1427
    %2326 = vmatprep.subr.bf16.mxu0 %v1434
    %2327 = vmatpush1.bf16.msra.mxu0 %v1433
    %2328 = vmatprep.subr.bf16.mxu0 %v1440
    %2329 = vmatpush1.bf16.msra.mxu0 %v1439
    %2330 = vmatprep.subr.bf16.mxu0 %v1446
    %2331 = vmatpush1.bf16.msra.mxu0 %v1445
    %2332 = vmatprep.subr.bf16.mxu0 %v1452
    %2333 = vmatpush1.bf16.msra.mxu0 %v1451
    %2334 = vmatprep.subr.bf16.mxu0 %v1458
    %2335 = vmatpush1.bf16.msra.mxu0 %v1457
    %2336 = vmatprep.subr.bf16.mxu0 %v1464
    %2337 = vmatpush1.bf16.msra.mxu0 %v1463
    %2338 = vmatprep.subr.bf16.mxu0 %v1470
    %2339 = vmatpush1.bf16.msra.mxu0 %v1469
    %2340 = vmatprep.subr.bf16.mxu0 %v1476
    %2341 = vmatpush1.bf16.msra.mxu0 %v1475
    %2342 = vmatprep.subr.bf16.mxu0 %v1482
    %2343 = vmatpush1.bf16.msra.mxu0 %v1481
    %2344 = vmatprep.subr.bf16.mxu0 %v1488
    %2345 = vmatpush1.bf16.msra.mxu0 %v1487
    %2346 = vmatprep.subr.bf16.mxu0 %v1494
    %2347 = vmatpush1.bf16.msra.mxu0 %v1493
    %2348 = vmatprep.mubr.bf16.mxu0 %v170
    %2349 = vmatmul.mubr.bf16.gmra.mrb[0].mxu0 %v169
    %v2350 = vpop.f32.mrb[0].mxu0
    %v2351 = vadd.f32 %v518, %v2350
    %v2352 = vpop.f32.mrb[0].mxu0
    %v2353 = vadd.f32 %v522, %v2352
    %v2354 = vpop.f32.mrb[0].mxu0
    %v2355 = vadd.f32 %v518, %v2354
    %v2356 = vpop.f32.mrb[0].mxu0
    %v2357 = vadd.f32 %v522, %v2356
    %2358 = vmatprep.mubr.bf16.mxu0 %v176
    %2359 = vmatmul.mubr.bf16.gmra.mrb[0].mxu0 %v175
    %v2360 = vpop.f32.mrb[0].mxu0
    %v2361 = vadd.f32 %v518, %v2360
    %v2362 = vpop.f32.mrb[0].mxu0
    %v2363 = vadd.f32 %v522, %v2362
    %v2364 = vpop.f32.mrb[0].mxu0
    %v2365 = vadd.f32 %v518, %v2364
    %v2366 = vpop.f32.mrb[0].mxu0
    %v2367 = vadd.f32 %v522, %v2366
    %2368 = vmatprep.mubr.bf16.mxu0 %v182
    %2369 = vmatmul.mubr.bf16.gmra.mrb[0].mxu0 %v181
    %v2370 = vpop.f32.mrb[0].mxu0
    %v2371 = vadd.f32 %v518, %v2370
    %v2372 = vpop.f32.mrb[0].mxu0
    %v2373 = vadd.f32 %v522, %v2372
    %v2374 = vpop.f32.mrb[0].mxu0
    %v2375 = vadd.f32 %v518, %v2374
    %v2376 = vpop.f32.mrb[0].mxu0
    %v2377 = vadd.f32 %v522, %v2376
    %2378 = vmatprep.mubr.bf16.mxu0 %v188
    %2379 = vmatmul.mubr.bf16.gmra.mrb[0].mxu0 %v187
    %v2380 = vpop.f32.mrb[0].mxu0
    %v2381 = vadd.f32 %v518, %v2380
    %v2382 = vpop.f32.mrb[0].mxu0
    %v2383 = vadd.f32 %v522, %v2382
    %v2384 = vpop.f32.mrb[0].mxu0
    %v2385 = vadd.f32 %v518, %v2384
    %v2386 = vpop.f32.mrb[0].mxu0
    %v2387 = vadd.f32 %v522, %v2386
    %2388 = vmatprep.mubr.bf16.mxu0 %v194
    %2389 = vmatmul.mubr.bf16.gmra.mrb[0].mxu0 %v193
    %v2390 = vpop.f32.mrb[0].mxu0
    %v2391 = vadd.f32 %v518, %v2390
    %v2392 = vpop.f32.mrb[0].mxu0
    %v2393 = vadd.f32 %v522, %v2392
    %v2394 = vpop.f32.mrb[0].mxu0
    %v2395 = vadd.f32 %v518, %v2394
    %v2396 = vpop.f32.mrb[0].mxu0
    %v2397 = vadd.f32 %v522, %v2396
    %2398 = vmatprep.mubr.bf16.mxu0 %v200
    %2399 = vmatmul.mubr.bf16.gmra.mrb[0].mxu0 %v199
    %v2400 = vpop.f32.mrb[0].mxu0
    %v2401 = vadd.f32 %v518, %v2400
    %v2402 = vpop.f32.mrb[0].mxu0
    %v2403 = vadd.f32 %v522, %v2402
    %v2404 = vpop.f32.mrb[0].mxu0
    %v2405 = vadd.f32 %v518, %v2404
    %v2406 = vpop.f32.mrb[0].mxu0
    %v2407 = vadd.f32 %v522, %v2406
    %2408 = vmatprep.mubr.bf16.mxu0 %v206
    %2409 = vmatmul.mubr.bf16.gmra.mrb[0].mxu0 %v205
    %v2410 = vpop.f32.mrb[0].mxu0
    %v2411 = vadd.f32 %v518, %v2410
    %v2412 = vpop.f32.mrb[0].mxu0
    %v2413 = vadd.f32 %v522, %v2412
    %v2414 = vpop.f32.mrb[0].mxu0
    %v2415 = vadd.f32 %v518, %v2414
    %v2416 = vpop.f32.mrb[0].mxu0
    %v2417 = vadd.f32 %v522, %v2416
    %2418 = vmatprep.mubr.bf16.mxu0 %v212
    %2419 = vmatmul.mubr.bf16.gmra.mrb[0].mxu0 %v211
    %v2420 = vpop.f32.mrb[0].mxu0
    %v2421 = vadd.f32 %v518, %v2420
    %v2422 = vpop.f32.mrb[0].mxu0
    %v2423 = vadd.f32 %v522, %v2422
    %v2424 = vpop.f32.mrb[0].mxu0
    %v2425 = vadd.f32 %v518, %v2424
    %v2426 = vpop.f32.mrb[0].mxu0
    %v2427 = vadd.f32 %v522, %v2426
    %2428 = vdwg.mxu0
    %2429 = vmatprep.subr.bf16.mxu0 %v1500
    %2430 = vmatpush1.bf16.msra.mxu0 %v1499
    %2431 = vmatprep.subr.bf16.mxu0 %v1506
    %2432 = vmatpush1.bf16.msra.mxu0 %v1505
    %2433 = vmatprep.subr.bf16.mxu0 %v1512
    %2434 = vmatpush1.bf16.msra.mxu0 %v1511
    %2435 = vmatprep.subr.bf16.mxu0 %v1518
    %2436 = vmatpush1.bf16.msra.mxu0 %v1517
    %2437 = vmatprep.subr.bf16.mxu0 %v1524
    %2438 = vmatpush1.bf16.msra.mxu0 %v1523
    %2439 = vmatprep.subr.bf16.mxu0 %v1530
    %2440 = vmatpush1.bf16.msra.mxu0 %v1529
    %2441 = vmatprep.subr.bf16.mxu0 %v1536
    %2442 = vmatpush1.bf16.msra.mxu0 %v1535
    %2443 = vmatprep.subr.bf16.mxu0 %v1542
    %2444 = vmatpush1.bf16.msra.mxu0 %v1541
    %2445 = vmatprep.subr.bf16.mxu0 %v1548
    %2446 = vmatpush1.bf16.msra.mxu0 %v1547
    %2447 = vmatprep.subr.bf16.mxu0 %v1554
    %2448 = vmatpush1.bf16.msra.mxu0 %v1553
    %2449 = vmatprep.subr.bf16.mxu0 %v1560
    %2450 = vmatpush1.bf16.msra.mxu0 %v1559
    %2451 = vmatprep.subr.bf16.mxu0 %v1566
    %2452 = vmatpush1.bf16.msra.mxu0 %v1565
    %2453 = vmatprep.subr.bf16.mxu0 %v1572
    %2454 = vmatpush1.bf16.msra.mxu0 %v1571
    %2455 = vmatprep.subr.bf16.mxu0 %v1578
    %2456 = vmatpush1.bf16.msra.mxu0 %v1577
    %2457 = vmatprep.subr.bf16.mxu0 %v1584
    %2458 = vmatpush1.bf16.msra.mxu0 %v1583
    %2459 = vmatprep.subr.bf16.mxu0 %v1590
    %2460 = vmatpush1.bf16.msra.mxu0 %v1589
    %2461 = vmatprep.mubr.bf16.mxu0 %v172
    %2462 = vmatmul.mubr.bf16.gmra.mrb[0].mxu0 %v171
    %v2463 = vpop.f32.mrb[0].mxu0
    %v2464 = vadd.f32 %v2351, %v2463
    %v2465 = vpop.f32.mrb[0].mxu0
    %v2466 = vadd.f32 %v2353, %v2465
    %v2467 = vpop.f32.mrb[0].mxu0
    %v2468 = vadd.f32 %v2355, %v2467
    %v2469 = vpop.f32.mrb[0].mxu0
    %v2470 = vadd.f32 %v2357, %v2469
    %2471 = vmatprep.mubr.bf16.mxu0 %v178
    %2472 = vmatmul.mubr.bf16.gmra.mrb[0].mxu0 %v177
    %v2473 = vpop.f32.mrb[0].mxu0
    %v2474 = vadd.f32 %v2361, %v2473
    %v2475 = vpop.f32.mrb[0].mxu0
    %v2476 = vadd.f32 %v2363, %v2475
    %v2477 = vpop.f32.mrb[0].mxu0
    %v2478 = vadd.f32 %v2365, %v2477
    %v2479 = vpop.f32.mrb[0].mxu0
    %v2480 = vadd.f32 %v2367, %v2479
    %2481 = vmatprep.mubr.bf16.mxu0 %v184
    %2482 = vmatmul.mubr.bf16.gmra.mrb[0].mxu0 %v183
    %v2483 = vpop.f32.mrb[0].mxu0
    %v2484 = vadd.f32 %v2371, %v2483
    %v2485 = vpop.f32.mrb[0].mxu0
    %v2486 = vadd.f32 %v2373, %v2485
    %v2487 = vpop.f32.mrb[0].mxu0
    %v2488 = vadd.f32 %v2375, %v2487
    %v2489 = vpop.f32.mrb[0].mxu0
    %v2490 = vadd.f32 %v2377, %v2489
    %2491 = vmatprep.mubr.bf16.mxu0 %v190
    %2492 = vmatmul.mubr.bf16.gmra.mrb[0].mxu0 %v189
    %v2493 = vpop.f32.mrb[0].mxu0
    %v2494 = vadd.f32 %v2381, %v2493
    %v2495 = vpop.f32.mrb[0].mxu0
    %v2496 = vadd.f32 %v2383, %v2495
    %v2497 = vpop.f32.mrb[0].mxu0
    %v2498 = vadd.f32 %v2385, %v2497
    %v2499 = vpop.f32.mrb[0].mxu0
    %v2500 = vadd.f32 %v2387, %v2499
    %2501 = vmatprep.mubr.bf16.mxu0 %v196
    %2502 = vmatmul.mubr.bf16.gmra.mrb[0].mxu0 %v195
    %v2503 = vpop.f32.mrb[0].mxu0
    %v2504 = vadd.f32 %v2391, %v2503
    %v2505 = vpop.f32.mrb[0].mxu0
    %v2506 = vadd.f32 %v2393, %v2505
    %v2507 = vpop.f32.mrb[0].mxu0
    %v2508 = vadd.f32 %v2395, %v2507
    %v2509 = vpop.f32.mrb[0].mxu0
    %v2510 = vadd.f32 %v2397, %v2509
    %2511 = vmatprep.mubr.bf16.mxu0 %v202
    %2512 = vmatmul.mubr.bf16.gmra.mrb[0].mxu0 %v201
    %v2513 = vpop.f32.mrb[0].mxu0
    %v2514 = vadd.f32 %v2401, %v2513
    %v2515 = vpop.f32.mrb[0].mxu0
    %v2516 = vadd.f32 %v2403, %v2515
    %v2517 = vpop.f32.mrb[0].mxu0
    %v2518 = vadd.f32 %v2405, %v2517
    %v2519 = vpop.f32.mrb[0].mxu0
    %v2520 = vadd.f32 %v2407, %v2519
    %2521 = vmatprep.mubr.bf16.mxu0 %v208
    %2522 = vmatmul.mubr.bf16.gmra.mrb[0].mxu0 %v207
    %v2523 = vpop.f32.mrb[0].mxu0
    %v2524 = vadd.f32 %v2411, %v2523
    %v2525 = vpop.f32.mrb[0].mxu0
    %v2526 = vadd.f32 %v2413, %v2525
    %v2527 = vpop.f32.mrb[0].mxu0
    %v2528 = vadd.f32 %v2415, %v2527
    %v2529 = vpop.f32.mrb[0].mxu0
    %v2530 = vadd.f32 %v2417, %v2529
    %2531 = vmatprep.mubr.bf16.mxu0 %v214
    %2532 = vmatmul.mubr.bf16.gmra.mrb[0].mxu0 %v213
    %v2533 = vpop.f32.mrb[0].mxu0
    %v2534 = vadd.f32 %v2421, %v2533
    %v2535 = vpop.f32.mrb[0].mxu0
    %v2536 = vadd.f32 %v2423, %v2535
    %v2537 = vpop.f32.mrb[0].mxu0
    %v2538 = vadd.f32 %v2425, %v2537
    %v2539 = vpop.f32.mrb[0].mxu0
    %v2540 = vadd.f32 %v2427, %v2539
    %2541 = vdwg.mxu0
    %2542 = vmatprep.subr.bf16.mxu0 %v1596
    %2543 = vmatpush1.bf16.msra.mxu0 %v1595
    %2544 = vmatprep.subr.bf16.mxu0 %v1602
    %2545 = vmatpush1.bf16.msra.mxu0 %v1601
    %2546 = vmatprep.subr.bf16.mxu0 %v1608
    %2547 = vmatpush1.bf16.msra.mxu0 %v1607
    %2548 = vmatprep.subr.bf16.mxu0 %v1614
    %2549 = vmatpush1.bf16.msra.mxu0 %v1613
    %2550 = vmatprep.subr.bf16.mxu0 %v1620
    %2551 = vmatpush1.bf16.msra.mxu0 %v1619
    %2552 = vmatprep.subr.bf16.mxu0 %v1626
    %2553 = vmatpush1.bf16.msra.mxu0 %v1625
    %2554 = vmatprep.subr.bf16.mxu0 %v1632
    %2555 = vmatpush1.bf16.msra.mxu0 %v1631
    %2556 = vmatprep.subr.bf16.mxu0 %v1638
    %2557 = vmatpush1.bf16.msra.mxu0 %v1637
    %2558 = vmatprep.subr.bf16.mxu0 %v1644
    %2559 = vmatpush1.bf16.msra.mxu0 %v1643
    %2560 = vmatprep.subr.bf16.mxu0 %v1650
    %2561 = vmatpush1.bf16.msra.mxu0 %v1649
    %2562 = vmatprep.subr.bf16.mxu0 %v1656
    %2563 = vmatpush1.bf16.msra.mxu0 %v1655
    %2564 = vmatprep.subr.bf16.mxu0 %v1662
    %2565 = vmatpush1.bf16.msra.mxu0 %v1661
    %2566 = vmatprep.subr.bf16.mxu0 %v1668
    %2567 = vmatpush1.bf16.msra.mxu0 %v1667
    %2568 = vmatprep.subr.bf16.mxu0 %v1674
    %2569 = vmatpush1.bf16.msra.mxu0 %v1673
    %2570 = vmatprep.subr.bf16.mxu0 %v1680
    %2571 = vmatpush1.bf16.msra.mxu0 %v1679
    %2572 = vmatprep.subr.bf16.mxu0 %v1686
    %2573 = vmatpush1.bf16.msra.mxu0 %v1685
    %2574 = vmatprep.mubr.bf16.mxu0 %v174
    %2575 = vmatmul.mubr.bf16.gmra.mrb[0].mxu0 %v173
    %v2576 = vpop.f32.mrb[0].mxu0
    %v2577 = vadd.f32 %v2464, %v2576
    %v2578 = vpop.f32.mrb[0].mxu0
    %v2579 = vadd.f32 %v2466, %v2578
    %v2580 = vpop.f32.mrb[0].mxu0
    %v2581 = vadd.f32 %v2468, %v2580
    %v2582 = vpop.f32.mrb[0].mxu0
    %v2583 = vadd.f32 %v2470, %v2582
    %2584 = vmatprep.mubr.bf16.mxu0 %v180
    %2585 = vmatmul.mubr.bf16.gmra.mrb[0].mxu0 %v179
    %v2586 = vpop.f32.mrb[0].mxu0
    %v2587 = vadd.f32 %v2474, %v2586
    %v2588 = vpop.f32.mrb[0].mxu0
    %v2589 = vadd.f32 %v2476, %v2588
    %v2590 = vpop.f32.mrb[0].mxu0
    %v2591 = vadd.f32 %v2478, %v2590
    %v2592 = vpop.f32.mrb[0].mxu0
    %v2593 = vadd.f32 %v2480, %v2592
    %2594 = vmatprep.mubr.bf16.mxu0 %v186
    %2595 = vmatmul.mubr.bf16.gmra.mrb[0].mxu0 %v185
    %v2596 = vpop.f32.mrb[0].mxu0
    %v2597 = vadd.f32 %v2484, %v2596
    %v2598 = vpop.f32.mrb[0].mxu0
    %v2599 = vadd.f32 %v2486, %v2598
    %v2600 = vpop.f32.mrb[0].mxu0
    %v2601 = vadd.f32 %v2488, %v2600
    %v2602 = vpop.f32.mrb[0].mxu0
    %v2603 = vadd.f32 %v2490, %v2602
    %2604 = vmatprep.mubr.bf16.mxu0 %v192
    %2605 = vmatmul.mubr.bf16.gmra.mrb[0].mxu0 %v191
    %v2606 = vpop.f32.mrb[0].mxu0
    %v2607 = vadd.f32 %v2494, %v2606
    %v2608 = vpop.f32.mrb[0].mxu0
    %v2609 = vadd.f32 %v2496, %v2608
    %v2610 = vpop.f32.mrb[0].mxu0
    %v2611 = vadd.f32 %v2498, %v2610
    %v2612 = vpop.f32.mrb[0].mxu0
    %v2613 = vadd.f32 %v2500, %v2612
    %2614 = vmatprep.mubr.bf16.mxu0 %v198
    %2615 = vmatmul.mubr.bf16.gmra.mrb[0].mxu0 %v197
    %v2616 = vpop.f32.mrb[0].mxu0
    %v2617 = vadd.f32 %v2504, %v2616
    %v2618 = vpop.f32.mrb[0].mxu0
    %v2619 = vadd.f32 %v2506, %v2618
    %v2620 = vpop.f32.mrb[0].mxu0
    %v2621 = vadd.f32 %v2508, %v2620
    %v2622 = vpop.f32.mrb[0].mxu0
    %v2623 = vadd.f32 %v2510, %v2622
    %2624 = vmatprep.mubr.bf16.mxu0 %v204
    %2625 = vmatmul.mubr.bf16.gmra.mrb[0].mxu0 %v203
    %v2626 = vpop.f32.mrb[0].mxu0
    %v2627 = vadd.f32 %v2514, %v2626
    %v2628 = vpop.f32.mrb[0].mxu0
    %v2629 = vadd.f32 %v2516, %v2628
    %v2630 = vpop.f32.mrb[0].mxu0
    %v2631 = vadd.f32 %v2518, %v2630
    %v2632 = vpop.f32.mrb[0].mxu0
    %v2633 = vadd.f32 %v2520, %v2632
    %2634 = vmatprep.mubr.bf16.mxu0 %v210
    %2635 = vmatmul.mubr.bf16.gmra.mrb[0].mxu0 %v209
    %v2636 = vpop.f32.mrb[0].mxu0
    %v2637 = vadd.f32 %v2524, %v2636
    %v2638 = vpop.f32.mrb[0].mxu0
    %v2639 = vadd.f32 %v2526, %v2638
    %v2640 = vpop.f32.mrb[0].mxu0
    %v2641 = vadd.f32 %v2528, %v2640
    %v2642 = vpop.f32.mrb[0].mxu0
    %v2643 = vadd.f32 %v2530, %v2642
    %2644 = vmatprep.mubr.bf16.mxu0 %v216
    %2645 = vmatmul.mubr.bf16.gmra.mrb[0].mxu0 %v215
    %v2646 = vpop.f32.mrb[0].mxu0
    %v2647 = vadd.f32 %v2534, %v2646
    %v2648 = vpop.f32.mrb[0].mxu0
    %v2649 = vadd.f32 %v2536, %v2648
    %v2650 = vpop.f32.mrb[0].mxu0
    %v2651 = vadd.f32 %v2538, %v2650
    %v2652 = vpop.f32.mrb[0].mxu0
    %v2653 = vadd.f32 %v2540, %v2652
    %2654 = vdwg.mxu0
    %2655 = vmatprep.subr.bf16.mxu0 %v1406
    %2656 = vmatpush1.bf16.msra.mxu0 %v1405
    %2657 = vmatprep.subr.bf16.mxu0 %v1412
    %2658 = vmatpush1.bf16.msra.mxu0 %v1411
    %2659 = vmatprep.subr.bf16.mxu0 %v1418
    %2660 = vmatpush1.bf16.msra.mxu0 %v1417
    %2661 = vmatprep.subr.bf16.mxu0 %v1424
    %2662 = vmatpush1.bf16.msra.mxu0 %v1423
    %2663 = vmatprep.subr.bf16.mxu0 %v1430
    %2664 = vmatpush1.bf16.msra.mxu0 %v1429
    %2665 = vmatprep.subr.bf16.mxu0 %v1436
    %2666 = vmatpush1.bf16.msra.mxu0 %v1435
    %2667 = vmatprep.subr.bf16.mxu0 %v1442
    %2668 = vmatpush1.bf16.msra.mxu0 %v1441
    %2669 = vmatprep.subr.bf16.mxu0 %v1448
    %2670 = vmatpush1.bf16.msra.mxu0 %v1447
    %2671 = vmatprep.subr.bf16.mxu0 %v1454
    %2672 = vmatpush1.bf16.msra.mxu0 %v1453
    %2673 = vmatprep.subr.bf16.mxu0 %v1460
    %2674 = vmatpush1.bf16.msra.mxu0 %v1459
    %2675 = vmatprep.subr.bf16.mxu0 %v1466
    %2676 = vmatpush1.bf16.msra.mxu0 %v1465
    %2677 = vmatprep.subr.bf16.mxu0 %v1472
    %2678 = vmatpush1.bf16.msra.mxu0 %v1471
    %2679 = vmatprep.subr.bf16.mxu0 %v1478
    %2680 = vmatpush1.bf16.msra.mxu0 %v1477
    %2681 = vmatprep.subr.bf16.mxu0 %v1484
    %2682 = vmatpush1.bf16.msra.mxu0 %v1483
    %2683 = vmatprep.subr.bf16.mxu0 %v1490
    %2684 = vmatpush1.bf16.msra.mxu0 %v1489
    %2685 = vmatprep.subr.bf16.mxu0 %v1496
    %2686 = vmatpush1.bf16.msra.mxu0 %v1495
    %2687 = vmatprep.mubr.bf16.mxu0 %v170
    %2688 = vmatmul.mubr.bf16.gmra.mrb[0].mxu0 %v169
    %v2689 = vpop.f32.mrb[0].mxu0
    %v2690 = vadd.f32 %v526, %v2689
    %v2691 = vpop.f32.mrb[0].mxu0
    %v2692 = vadd.f32 %v530, %v2691
    %v2693 = vpop.f32.mrb[0].mxu0
    %v2694 = vadd.f32 %v526, %v2693
    %v2695 = vpop.f32.mrb[0].mxu0
    %v2696 = vadd.f32 %v530, %v2695
    %2697 = vmatprep.mubr.bf16.mxu0 %v176
    %2698 = vmatmul.mubr.bf16.gmra.mrb[0].mxu0 %v175
    %v2699 = vpop.f32.mrb[0].mxu0
    %v2700 = vadd.f32 %v526, %v2699
    %v2701 = vpop.f32.mrb[0].mxu0
    %v2702 = vadd.f32 %v530, %v2701
    %v2703 = vpop.f32.mrb[0].mxu0
    %v2704 = vadd.f32 %v526, %v2703
    %v2705 = vpop.f32.mrb[0].mxu0
    %v2706 = vadd.f32 %v530, %v2705
    %2707 = vmatprep.mubr.bf16.mxu0 %v182
    %2708 = vmatmul.mubr.bf16.gmra.mrb[0].mxu0 %v181
    %v2709 = vpop.f32.mrb[0].mxu0
    %v2710 = vadd.f32 %v526, %v2709
    %v2711 = vpop.f32.mrb[0].mxu0
    %v2712 = vadd.f32 %v530, %v2711
    %v2713 = vpop.f32.mrb[0].mxu0
    %v2714 = vadd.f32 %v526, %v2713
    %v2715 = vpop.f32.mrb[0].mxu0
    %v2716 = vadd.f32 %v530, %v2715
    %2717 = vmatprep.mubr.bf16.mxu0 %v188
    %2718 = vmatmul.mubr.bf16.gmra.mrb[0].mxu0 %v187
    %v2719 = vpop.f32.mrb[0].mxu0
    %v2720 = vadd.f32 %v526, %v2719
    %v2721 = vpop.f32.mrb[0].mxu0
    %v2722 = vadd.f32 %v530, %v2721
    %v2723 = vpop.f32.mrb[0].mxu0
    %v2724 = vadd.f32 %v526, %v2723
    %v2725 = vpop.f32.mrb[0].mxu0
    %v2726 = vadd.f32 %v530, %v2725
    %2727 = vmatprep.mubr.bf16.mxu0 %v194
    %2728 = vmatmul.mubr.bf16.gmra.mrb[0].mxu0 %v193
    %v2729 = vpop.f32.mrb[0].mxu0
    %v2730 = vadd.f32 %v526, %v2729
    %v2731 = vpop.f32.mrb[0].mxu0
    %v2732 = vadd.f32 %v530, %v2731
    %v2733 = vpop.f32.mrb[0].mxu0
    %v2734 = vadd.f32 %v526, %v2733
    %v2735 = vpop.f32.mrb[0].mxu0
    %v2736 = vadd.f32 %v530, %v2735
    %2737 = vmatprep.mubr.bf16.mxu0 %v200
    %2738 = vmatmul.mubr.bf16.gmra.mrb[0].mxu0 %v199
    %v2739 = vpop.f32.mrb[0].mxu0
    %v2740 = vadd.f32 %v526, %v2739
    %v2741 = vpop.f32.mrb[0].mxu0
    %v2742 = vadd.f32 %v530, %v2741
    %v2743 = vpop.f32.mrb[0].mxu0
    %v2744 = vadd.f32 %v526, %v2743
    %v2745 = vpop.f32.mrb[0].mxu0
    %v2746 = vadd.f32 %v530, %v2745
    %2747 = vmatprep.mubr.bf16.mxu0 %v206
    %2748 = vmatmul.mubr.bf16.gmra.mrb[0].mxu0 %v205
    %v2749 = vpop.f32.mrb[0].mxu0
    %v2750 = vadd.f32 %v526, %v2749
    %v2751 = vpop.f32.mrb[0].mxu0
    %v2752 = vadd.f32 %v530, %v2751
    %v2753 = vpop.f32.mrb[0].mxu0
    %v2754 = vadd.f32 %v526, %v2753
    %v2755 = vpop.f32.mrb[0].mxu0
    %v2756 = vadd.f32 %v530, %v2755
    %2757 = vmatprep.mubr.bf16.mxu0 %v212
    %2758 = vmatmul.mubr.bf16.gmra.mrb[0].mxu0 %v211
    %v2759 = vpop.f32.mrb[0].mxu0
    %v2760 = vadd.f32 %v526, %v2759
    %v2761 = vpop.f32.mrb[0].mxu0
    %v2762 = vadd.f32 %v530, %v2761
    %v2763 = vpop.f32.mrb[0].mxu0
    %v2764 = vadd.f32 %v526, %v2763
    %v2765 = vpop.f32.mrb[0].mxu0
    %v2766 = vadd.f32 %v530, %v2765
    %2767 = vdwg.mxu0
    %2768 = vmatprep.subr.bf16.mxu0 %v1502
    %2769 = vmatpush1.bf16.msra.mxu0 %v1501
    %2770 = vmatprep.subr.bf16.mxu0 %v1508
    %2771 = vmatpush1.bf16.msra.mxu0 %v1507
    %2772 = vmatprep.subr.bf16.mxu0 %v1514
    %2773 = vmatpush1.bf16.msra.mxu0 %v1513
    %2774 = vmatprep.subr.bf16.mxu0 %v1520
    %2775 = vmatpush1.bf16.msra.mxu0 %v1519
    %2776 = vmatprep.subr.bf16.mxu0 %v1526
    %2777 = vmatpush1.bf16.msra.mxu0 %v1525
    %2778 = vmatprep.subr.bf16.mxu0 %v1532
    %2779 = vmatpush1.bf16.msra.mxu0 %v1531
    %2780 = vmatprep.subr.bf16.mxu0 %v1538
    %2781 = vmatpush1.bf16.msra.mxu0 %v1537
    %2782 = vmatprep.subr.bf16.mxu0 %v1544
    %2783 = vmatpush1.bf16.msra.mxu0 %v1543
    %2784 = vmatprep.subr.bf16.mxu0 %v1550
    %2785 = vmatpush1.bf16.msra.mxu0 %v1549
    %2786 = vmatprep.subr.bf16.mxu0 %v1556
    %2787 = vmatpush1.bf16.msra.mxu0 %v1555
    %2788 = vmatprep.subr.bf16.mxu0 %v1562
    %2789 = vmatpush1.bf16.msra.mxu0 %v1561
    %2790 = vmatprep.subr.bf16.mxu0 %v1568
    %2791 = vmatpush1.bf16.msra.mxu0 %v1567
    %2792 = vmatprep.subr.bf16.mxu0 %v1574
    %2793 = vmatpush1.bf16.msra.mxu0 %v1573
    %2794 = vmatprep.subr.bf16.mxu0 %v1580
    %2795 = vmatpush1.bf16.msra.mxu0 %v1579
    %2796 = vmatprep.subr.bf16.mxu0 %v1586
    %2797 = vmatpush1.bf16.msra.mxu0 %v1585
    %2798 = vmatprep.subr.bf16.mxu0 %v1592
    %2799 = vmatpush1.bf16.msra.mxu0 %v1591
    %2800 = vmatprep.mubr.bf16.mxu0 %v172
    %2801 = vmatmul.mubr.bf16.gmra.mrb[0].mxu0 %v171
    %v2802 = vpop.f32.mrb[0].mxu0
    %v2803 = vadd.f32 %v2690, %v2802
    %v2804 = vpop.f32.mrb[0].mxu0
    %v2805 = vadd.f32 %v2692, %v2804
    %v2806 = vpop.f32.mrb[0].mxu0
    %v2807 = vadd.f32 %v2694, %v2806
    %v2808 = vpop.f32.mrb[0].mxu0
    %v2809 = vadd.f32 %v2696, %v2808
    %2810 = vmatprep.mubr.bf16.mxu0 %v178
    %2811 = vmatmul.mubr.bf16.gmra.mrb[0].mxu0 %v177
    %v2812 = vpop.f32.mrb[0].mxu0
    %v2813 = vadd.f32 %v2700, %v2812
    %v2814 = vpop.f32.mrb[0].mxu0
    %v2815 = vadd.f32 %v2702, %v2814
    %v2816 = vpop.f32.mrb[0].mxu0
    %v2817 = vadd.f32 %v2704, %v2816
    %v2818 = vpop.f32.mrb[0].mxu0
    %v2819 = vadd.f32 %v2706, %v2818
    %2820 = vmatprep.mubr.bf16.mxu0 %v184
    %2821 = vmatmul.mubr.bf16.gmra.mrb[0].mxu0 %v183
    %v2822 = vpop.f32.mrb[0].mxu0
    %v2823 = vadd.f32 %v2710, %v2822
    %v2824 = vpop.f32.mrb[0].mxu0
    %v2825 = vadd.f32 %v2712, %v2824
    %v2826 = vpop.f32.mrb[0].mxu0
    %v2827 = vadd.f32 %v2714, %v2826
    %v2828 = vpop.f32.mrb[0].mxu0
    %v2829 = vadd.f32 %v2716, %v2828
    %2830 = vmatprep.mubr.bf16.mxu0 %v190
    %2831 = vmatmul.mubr.bf16.gmra.mrb[0].mxu0 %v189
    %v2832 = vpop.f32.mrb[0].mxu0
    %v2833 = vadd.f32 %v2720, %v2832
    %v2834 = vpop.f32.mrb[0].mxu0
    %v2835 = vadd.f32 %v2722, %v2834
    %v2836 = vpop.f32.mrb[0].mxu0
    %v2837 = vadd.f32 %v2724, %v2836
    %v2838 = vpop.f32.mrb[0].mxu0
    %v2839 = vadd.f32 %v2726, %v2838
    %2840 = vmatprep.mubr.bf16.mxu0 %v196
    %2841 = vmatmul.mubr.bf16.gmra.mrb[0].mxu0 %v195
    %v2842 = vpop.f32.mrb[0].mxu0
    %v2843 = vadd.f32 %v2730, %v2842
    %v2844 = vpop.f32.mrb[0].mxu0
    %v2845 = vadd.f32 %v2732, %v2844
    %v2846 = vpop.f32.mrb[0].mxu0
    %v2847 = vadd.f32 %v2734, %v2846
    %v2848 = vpop.f32.mrb[0].mxu0
    %v2849 = vadd.f32 %v2736, %v2848
    %2850 = vmatprep.mubr.bf16.mxu0 %v202
    %2851 = vmatmul.mubr.bf16.gmra.mrb[0].mxu0 %v201
    %v2852 = vpop.f32.mrb[0].mxu0
    %v2853 = vadd.f32 %v2740, %v2852
    %v2854 = vpop.f32.mrb[0].mxu0
    %v2855 = vadd.f32 %v2742, %v2854
    %v2856 = vpop.f32.mrb[0].mxu0
    %v2857 = vadd.f32 %v2744, %v2856
    %v2858 = vpop.f32.mrb[0].mxu0
    %v2859 = vadd.f32 %v2746, %v2858
    %2860 = vmatprep.mubr.bf16.mxu0 %v208
    %2861 = vmatmul.mubr.bf16.gmra.mrb[0].mxu0 %v207
    %v2862 = vpop.f32.mrb[0].mxu0
    %v2863 = vadd.f32 %v2750, %v2862
    %v2864 = vpop.f32.mrb[0].mxu0
    %v2865 = vadd.f32 %v2752, %v2864
    %v2866 = vpop.f32.mrb[0].mxu0
    %v2867 = vadd.f32 %v2754, %v2866
    %v2868 = vpop.f32.mrb[0].mxu0
    %v2869 = vadd.f32 %v2756, %v2868
    %2870 = vmatprep.mubr.bf16.mxu0 %v214
    %2871 = vmatmul.mubr.bf16.gmra.mrb[0].mxu0 %v213
    %v2872 = vpop.f32.mrb[0].mxu0
    %v2873 = vadd.f32 %v2760, %v2872
    %v2874 = vpop.f32.mrb[0].mxu0
    %v2875 = vadd.f32 %v2762, %v2874
    %v2876 = vpop.f32.mrb[0].mxu0
    %v2877 = vadd.f32 %v2764, %v2876
    %v2878 = vpop.f32.mrb[0].mxu0
    %v2879 = vadd.f32 %v2766, %v2878
    %2880 = vdwg.mxu0
    %2881 = vmatprep.subr.bf16.mxu0 %v1598
    %2882 = vmatpush1.bf16.msra.mxu0 %v1597
    %2883 = vmatprep.subr.bf16.mxu0 %v1604
    %2884 = vmatpush1.bf16.msra.mxu0 %v1603
    %2885 = vmatprep.subr.bf16.mxu0 %v1610
    %2886 = vmatpush1.bf16.msra.mxu0 %v1609
    %2887 = vmatprep.subr.bf16.mxu0 %v1616
    %2888 = vmatpush1.bf16.msra.mxu0 %v1615
    %2889 = vmatprep.subr.bf16.mxu0 %v1622
    %2890 = vmatpush1.bf16.msra.mxu0 %v1621
    %2891 = vmatprep.subr.bf16.mxu0 %v1628
    %2892 = vmatpush1.bf16.msra.mxu0 %v1627
    %2893 = vmatprep.subr.bf16.mxu0 %v1634
    %2894 = vmatpush1.bf16.msra.mxu0 %v1633
    %2895 = vmatprep.subr.bf16.mxu0 %v1640
    %2896 = vmatpush1.bf16.msra.mxu0 %v1639
    %2897 = vmatprep.subr.bf16.mxu0 %v1646
    %2898 = vmatpush1.bf16.msra.mxu0 %v1645
    %2899 = vmatprep.subr.bf16.mxu0 %v1652
    %2900 = vmatpush1.bf16.msra.mxu0 %v1651
    %2901 = vmatprep.subr.bf16.mxu0 %v1658
    %2902 = vmatpush1.bf16.msra.mxu0 %v1657
    %2903 = vmatprep.subr.bf16.mxu0 %v1664
    %2904 = vmatpush1.bf16.msra.mxu0 %v1663
    %2905 = vmatprep.subr.bf16.mxu0 %v1670
    %2906 = vmatpush1.bf16.msra.mxu0 %v1669
    %2907 = vmatprep.subr.bf16.mxu0 %v1676
    %2908 = vmatpush1.bf16.msra.mxu0 %v1675
    %2909 = vmatprep.subr.bf16.mxu0 %v1682
    %2910 = vmatpush1.bf16.msra.mxu0 %v1681
    %2911 = vmatprep.subr.bf16.mxu0 %v1688
    %2912 = vmatpush1.bf16.msra.mxu0 %v1687
    %2913 = vmatprep.mubr.bf16.mxu0 %v174
    %2914 = vmatmul.mubr.bf16.gmra.mrb[0].mxu0 %v173
    %v2915 = vpop.f32.mrb[0].mxu0
    %v2916 = vadd.f32 %v2803, %v2915
    %v2917 = vpop.f32.mrb[0].mxu0
    %v2918 = vadd.f32 %v2805, %v2917
    %v2919 = vpop.f32.mrb[0].mxu0
    %v2920 = vadd.f32 %v2807, %v2919
    %v2921 = vpop.f32.mrb[0].mxu0
    %v2922 = vadd.f32 %v2809, %v2921
    %2923 = vmatprep.mubr.bf16.mxu0 %v180
    %2924 = vmatmul.mubr.bf16.gmra.mrb[0].mxu0 %v179
    %v2925 = vpop.f32.mrb[0].mxu0
    %v2926 = vadd.f32 %v2813, %v2925
    %v2927 = vpop.f32.mrb[0].mxu0
    %v2928 = vadd.f32 %v2815, %v2927
    %v2929 = vpop.f32.mrb[0].mxu0
    %v2930 = vadd.f32 %v2817, %v2929
    %v2931 = vpop.f32.mrb[0].mxu0
    %v2932 = vadd.f32 %v2819, %v2931
    %2933 = vmatprep.mubr.bf16.mxu0 %v186
    %2934 = vmatmul.mubr.bf16.gmra.mrb[0].mxu0 %v185
    %v2935 = vpop.f32.mrb[0].mxu0
    %v2936 = vadd.f32 %v2823, %v2935
    %v2937 = vpop.f32.mrb[0].mxu0
    %v2938 = vadd.f32 %v2825, %v2937
    %v2939 = vpop.f32.mrb[0].mxu0
    %v2940 = vadd.f32 %v2827, %v2939
    %v2941 = vpop.f32.mrb[0].mxu0
    %v2942 = vadd.f32 %v2829, %v2941
    %2943 = vmatprep.mubr.bf16.mxu0 %v192
    %2944 = vmatmul.mubr.bf16.gmra.mrb[0].mxu0 %v191
    %v2945 = vpop.f32.mrb[0].mxu0
    %v2946 = vadd.f32 %v2833, %v2945
    %v2947 = vpop.f32.mrb[0].mxu0
    %v2948 = vadd.f32 %v2835, %v2947
    %v2949 = vpop.f32.mrb[0].mxu0
    %v2950 = vadd.f32 %v2837, %v2949
    %v2951 = vpop.f32.mrb[0].mxu0
    %v2952 = vadd.f32 %v2839, %v2951
    %2953 = vmatprep.mubr.bf16.mxu0 %v198
    %2954 = vmatmul.mubr.bf16.gmra.mrb[0].mxu0 %v197
    %v2955 = vpop.f32.mrb[0].mxu0
    %v2956 = vadd.f32 %v2843, %v2955
    %v2957 = vpop.f32.mrb[0].mxu0
    %v2958 = vadd.f32 %v2845, %v2957
    %v2959 = vpop.f32.mrb[0].mxu0
    %v2960 = vadd.f32 %v2847, %v2959
    %v2961 = vpop.f32.mrb[0].mxu0
    %v2962 = vadd.f32 %v2849, %v2961
    %2963 = vmatprep.mubr.bf16.mxu0 %v204
    %2964 = vmatmul.mubr.bf16.gmra.mrb[0].mxu0 %v203
    %v2965 = vpop.f32.mrb[0].mxu0
    %v2966 = vadd.f32 %v2853, %v2965
    %v2967 = vpop.f32.mrb[0].mxu0
    %v2968 = vadd.f32 %v2855, %v2967
    %v2969 = vpop.f32.mrb[0].mxu0
    %v2970 = vadd.f32 %v2857, %v2969
    %v2971 = vpop.f32.mrb[0].mxu0
    %v2972 = vadd.f32 %v2859, %v2971
    %2973 = vmatprep.mubr.bf16.mxu0 %v210
    %2974 = vmatmul.mubr.bf16.gmra.mrb[0].mxu0 %v209
    %v2975 = vpop.f32.mrb[0].mxu0
    %v2976 = vadd.f32 %v2863, %v2975
    %v2977 = vpop.f32.mrb[0].mxu0
    %v2978 = vadd.f32 %v2865, %v2977
    %v2979 = vpop.f32.mrb[0].mxu0
    %v2980 = vadd.f32 %v2867, %v2979
    %v2981 = vpop.f32.mrb[0].mxu0
    %v2982 = vadd.f32 %v2869, %v2981
    %2983 = vmatprep.mubr.bf16.mxu0 %v216
    %2984 = vmatmul.mubr.bf16.gmra.mrb[0].mxu0 %v215
    %v2985 = vpop.f32.mrb[0].mxu0
    %v2986 = vadd.f32 %v2873, %v2985
    %v2987 = vpop.f32.mrb[0].mxu0
    %v2988 = vadd.f32 %v2875, %v2987
    %v2989 = vpop.f32.mrb[0].mxu0
    %v2990 = vadd.f32 %v2877, %v2989
    %v2991 = vpop.f32.mrb[0].mxu0
    %v2992 = vadd.f32 %v2879, %v2991
    %2993 = vdwg.mxu0
    %v2994 = vtanh.pop %v2238
    %v2995 = vtanh.pop %v2240
    %v2996 = vtanh.pop %v2577
    %v2997 = vtanh.pop %v2579
    %v2998 = vtanh.pop %v2916
    %v2999 = vtanh.pop %v2918
    %v3000 = vtanh.pop %v2242
    %v3001 = vtanh.pop %v2244
    %v3002 = vtanh.pop %v2581
    %v3003 = vtanh.pop %v2583
    %v3004 = vtanh.pop %v2920
    %v3005 = vtanh.pop %v2922
    %v3006 = vtanh.pop %v2248
    %v3007 = vtanh.pop %v2250
    %v3008 = vtanh.pop %v2587
    %v3009 = vtanh.pop %v2589
    %v3010 = vtanh.pop %v2926
    %v3011 = vtanh.pop %v2928
    %v3012 = vtanh.pop %v2252
    %v3013 = vtanh.pop %v2254
    %v3014 = vtanh.pop %v2591
    %v3015 = vtanh.pop %v2593
    %v3016 = vtanh.pop %v2930
    %v3017 = vtanh.pop %v2932
    %v3018 = vtanh.pop %v2258
    %v3019 = vtanh.pop %v2260
    %v3020 = vtanh.pop %v2597
    %v3021 = vtanh.pop %v2599
    %v3022 = vtanh.pop %v2936
    %v3023 = vtanh.pop %v2938
    %v3024 = vtanh.pop %v2262
    %v3025 = vtanh.pop %v2264
    %v3026 = vtanh.pop %v2601
    %v3027 = vtanh.pop %v2603
    %v3028 = vtanh.pop %v2940
    %v3029 = vtanh.pop %v2942
    %v3030 = vtanh.pop %v2268
    %v3031 = vtanh.pop %v2270
    %v3032 = vtanh.pop %v2607
    %v3033 = vtanh.pop %v2609
    %v3034 = vtanh.pop %v2946
    %v3035 = vtanh.pop %v2948
    %v3036 = vtanh.pop %v2272
    %v3037 = vtanh.pop %v2274
    %v3038 = vtanh.pop %v2611
    %v3039 = vtanh.pop %v2613
    %v3040 = vtanh.pop %v2950
    %v3041 = vtanh.pop %v2952
    %v3042 = vtanh.pop %v2278
    %v3043 = vtanh.pop %v2280
    %v3044 = vtanh.pop %v2617
    %v3045 = vtanh.pop %v2619
    %v3046 = vtanh.pop %v2956
    %v3047 = vtanh.pop %v2958
    %v3048 = vtanh.pop %v2282
    %v3049 = vtanh.pop %v2284
    %v3050 = vtanh.pop %v2621
    %v3051 = vtanh.pop %v2623
    %v3052 = vtanh.pop %v2960
    %v3053 = vtanh.pop %v2962
    %v3054 = vtanh.pop %v2288
    %v3055 = vtanh.pop %v2290
    %v3056 = vtanh.pop %v2627
    %v3057 = vtanh.pop %v2629
    %v3058 = vtanh.pop %v2966
    %v3059 = vtanh.pop %v2968
    %v3060 = vtanh.pop %v2292
    %v3061 = vtanh.pop %v2294
    %v3062 = vtanh.pop %v2631
    %v3063 = vtanh.pop %v2633
    %v3064 = vtanh.pop %v2970
    %v3065 = vtanh.pop %v2972
    %v3066 = vtanh.pop %v2298
    %v3067 = vtanh.pop %v2300
    %v3068 = vtanh.pop %v2637
    %v3069 = vtanh.pop %v2639
    %v3070 = vtanh.pop %v2976
    %v3071 = vtanh.pop %v2978
    %v3072 = vtanh.pop %v2302
    %v3073 = vtanh.pop %v2304
    %v3074 = vtanh.pop %v2641
    %v3075 = vtanh.pop %v2643
    %v3076 = vtanh.pop %v2980
    %v3077 = vtanh.pop %v2982
    %v3078 = vtanh.pop %v2308
    %v3079 = vtanh.pop %v2310
    %v3080 = vtanh.pop %v2647
    %v3081 = vtanh.pop %v2649
    %v3082 = vtanh.pop %v2986
    %v3083 = vtanh.pop %v2988
    %v3084 = vtanh.pop %v2312
    %v3085 = vtanh.pop %v2314
    %v3086 = vtanh.pop %v2651
    %v3087 = vtanh.pop %v2653
    %v3088 = vtanh.pop %v2990
    %v3089 = vtanh.pop %v2992
    %v3090 = vld [vmem:[#allocation9] sm:$0x3f]
    %v3092 = vlaneseq
    %v3093 = vshrl.u32 %v3092, 7
    %v3094 = vsub.s32 0, %v3093
    %v3095 = vrot.slane %v3090, %v3094
    %v3096 = vlaneseq
    %v3097 = vshrl.u32 %v3096, 7
    %v3098 = vsub.s32 1, %v3097
    %v3099 = vrot.slane %v3090, %v3098
    %v3100 = vlaneseq
    %v3101 = vshrl.u32 %v3100, 7
    %v3102 = vsub.s32 2, %v3101
    %v3103 = vrot.slane %v3090, %v3102
    %v3104 = vlaneseq
    %v3105 = vshrl.u32 %v3104, 7
    %v3106 = vsub.s32 3, %v3105
    %v3107 = vrot.slane %v3090, %v3106
    %v3108 = vlaneseq
    %v3109 = vshrl.u32 %v3108, 7
    %v3110 = vsub.s32 4, %v3109
    %v3111 = vrot.slane %v3090, %v3110
    %v3112 = vlaneseq
    %v3113 = vshrl.u32 %v3112, 7
    %v3114 = vsub.s32 5, %v3113
    %v3115 = vrot.slane %v3090, %v3114
    %v3122 = vmul.f32 %v2994, %v3095
    %v3123 = vmul.f32 %v2995, %v3099
    %v3124 = vmul.f32 %v2996, %v3103
    %v3125 = vmul.f32 %v2997, %v3107
    %v3126 = vmul.f32 %v2998, %v3111
    %v3127 = vmul.f32 %v2999, %v3115
    %v3128 = vmul.f32 %v3000, %v3095
    %v3129 = vmul.f32 %v3001, %v3099
    %v3130 = vmul.f32 %v3002, %v3103
    %v3131 = vmul.f32 %v3003, %v3107
    %v3132 = vmul.f32 %v3004, %v3111
    %v3133 = vmul.f32 %v3005, %v3115
    %v3134 = vmul.f32 %v3006, %v3095
    %v3135 = vmul.f32 %v3007, %v3099
    %v3136 = vmul.f32 %v3008, %v3103
    %v3137 = vmul.f32 %v3009, %v3107
    %v3138 = vmul.f32 %v3010, %v3111
    %v3139 = vmul.f32 %v3011, %v3115
    %v3140 = vmul.f32 %v3012, %v3095
    %v3141 = vmul.f32 %v3013, %v3099
    %v3142 = vmul.f32 %v3014, %v3103
    %v3143 = vmul.f32 %v3015, %v3107
    %v3144 = vmul.f32 %v3016, %v3111
    %v3145 = vmul.f32 %v3017, %v3115
    %v3146 = vmul.f32 %v3018, %v3095
    %v3147 = vmul.f32 %v3019, %v3099
    %v3148 = vmul.f32 %v3020, %v3103
    %v3149 = vmul.f32 %v3021, %v3107
    %v3150 = vmul.f32 %v3022, %v3111
    %v3151 = vmul.f32 %v3023, %v3115
    %v3152 = vmul.f32 %v3024, %v3095
    %v3153 = vmul.f32 %v3025, %v3099
    %v3154 = vmul.f32 %v3026, %v3103
    %v3155 = vmul.f32 %v3027, %v3107
    %v3156 = vmul.f32 %v3028, %v3111
    %v3157 = vmul.f32 %v3029, %v3115
    %v3158 = vmul.f32 %v3030, %v3095
    %v3159 = vmul.f32 %v3031, %v3099
    %v3160 = vmul.f32 %v3032, %v3103
    %v3161 = vmul.f32 %v3033, %v3107
    %v3162 = vmul.f32 %v3034, %v3111
    %v3163 = vmul.f32 %v3035, %v3115
    %v3164 = vmul.f32 %v3036, %v3095
    %v3165 = vmul.f32 %v3037, %v3099
    %v3166 = vmul.f32 %v3038, %v3103
    %v3167 = vmul.f32 %v3039, %v3107
    %v3168 = vmul.f32 %v3040, %v3111
    %v3169 = vmul.f32 %v3041, %v3115
    %v3170 = vmul.f32 %v3042, %v3095
    %v3171 = vmul.f32 %v3043, %v3099
    %v3172 = vmul.f32 %v3044, %v3103
    %v3173 = vmul.f32 %v3045, %v3107
    %v3174 = vmul.f32 %v3046, %v3111
    %v3175 = vmul.f32 %v3047, %v3115
    %v3176 = vmul.f32 %v3048, %v3095
    %v3177 = vmul.f32 %v3049, %v3099
    %v3178 = vmul.f32 %v3050, %v3103
    %v3179 = vmul.f32 %v3051, %v3107
    %v3180 = vmul.f32 %v3052, %v3111
    %v3181 = vmul.f32 %v3053, %v3115
    %v3182 = vmul.f32 %v3054, %v3095
    %v3183 = vmul.f32 %v3055, %v3099
    %v3184 = vmul.f32 %v3056, %v3103
    %v3185 = vmul.f32 %v3057, %v3107
    %v3186 = vmul.f32 %v3058, %v3111
    %v3187 = vmul.f32 %v3059, %v3115
    %v3188 = vmul.f32 %v3060, %v3095
    %v3189 = vmul.f32 %v3061, %v3099
    %v3190 = vmul.f32 %v3062, %v3103
    %v3191 = vmul.f32 %v3063, %v3107
    %v3192 = vmul.f32 %v3064, %v3111
    %v3193 = vmul.f32 %v3065, %v3115
    %v3194 = vmul.f32 %v3066, %v3095
    %v3195 = vmul.f32 %v3067, %v3099
    %v3196 = vmul.f32 %v3068, %v3103
    %v3197 = vmul.f32 %v3069, %v3107
    %v3198 = vmul.f32 %v3070, %v3111
    %v3199 = vmul.f32 %v3071, %v3115
    %v3200 = vmul.f32 %v3072, %v3095
    %v3201 = vmul.f32 %v3073, %v3099
    %v3202 = vmul.f32 %v3074, %v3103
    %v3203 = vmul.f32 %v3075, %v3107
    %v3204 = vmul.f32 %v3076, %v3111
    %v3205 = vmul.f32 %v3077, %v3115
    %v3206 = vmul.f32 %v3078, %v3095
    %v3207 = vmul.f32 %v3079, %v3099
    %v3208 = vmul.f32 %v3080, %v3103
    %v3209 = vmul.f32 %v3081, %v3107
    %v3210 = vmul.f32 %v3082, %v3111
    %v3211 = vmul.f32 %v3083, %v3115
    %v3212 = vmul.f32 %v3084, %v3095
    %v3213 = vmul.f32 %v3085, %v3099
    %v3214 = vmul.f32 %v3086, %v3103
    %v3215 = vmul.f32 %v3087, %v3107
    %v3216 = vmul.f32 %v3088, %v3111
    %v3217 = vmul.f32 %v3089, %v3115
    %v3218 = vadd.f32 %v3122, %v3123
    %v3219 = vadd.f32 %v3218, %v3124
    %v3220 = vadd.f32 %v3219, %v3125
    %v3221 = vadd.f32 %v3220, %v3126
    %v3222 = vadd.f32 %v3221, %v3127
    %3223 = vadd.xlane.f32.xlu0 %v3222
    %v3224 = vpop.xlane.xlu0 %3223
    %v3225 = vadd.f32 %v3128, %v3129
    %v3226 = vadd.f32 %v3225, %v3130
    %v3227 = vadd.f32 %v3226, %v3131
    %v3228 = vadd.f32 %v3227, %v3132
    %v3229 = vadd.f32 %v3228, %v3133
    %3230 = vadd.xlane.f32.xlu0 %v3229
    %v3231 = vpop.xlane.xlu0 %3230
    %v3232 = vadd.f32 %v3134, %v3135
    %v3233 = vadd.f32 %v3232, %v3136
    %v3234 = vadd.f32 %v3233, %v3137
    %v3235 = vadd.f32 %v3234, %v3138
    %v3236 = vadd.f32 %v3235, %v3139
    %3237 = vadd.xlane.f32.xlu0 %v3236
    %v3238 = vpop.xlane.xlu0 %3237
    %v3239 = vadd.f32 %v3140, %v3141
    %v3240 = vadd.f32 %v3239, %v3142
    %v3241 = vadd.f32 %v3240, %v3143
    %v3242 = vadd.f32 %v3241, %v3144
    %v3243 = vadd.f32 %v3242, %v3145
    %3244 = vadd.xlane.f32.xlu0 %v3243
    %v3245 = vpop.xlane.xlu0 %3244
    %v3246 = vadd.f32 %v3146, %v3147
    %v3247 = vadd.f32 %v3246, %v3148
    %v3248 = vadd.f32 %v3247, %v3149
    %v3249 = vadd.f32 %v3248, %v3150
    %v3250 = vadd.f32 %v3249, %v3151
    %3251 = vadd.xlane.f32.xlu0 %v3250
    %v3252 = vpop.xlane.xlu0 %3251
    %v3253 = vadd.f32 %v3152, %v3153
    %v3254 = vadd.f32 %v3253, %v3154
    %v3255 = vadd.f32 %v3254, %v3155
    %v3256 = vadd.f32 %v3255, %v3156
    %v3257 = vadd.f32 %v3256, %v3157
    %3258 = vadd.xlane.f32.xlu0 %v3257
    %v3259 = vpop.xlane.xlu0 %3258
    %v3260 = vadd.f32 %v3158, %v3159
    %v3261 = vadd.f32 %v3260, %v3160
    %v3262 = vadd.f32 %v3261, %v3161
    %v3263 = vadd.f32 %v3262, %v3162
    %v3264 = vadd.f32 %v3263, %v3163
    %3265 = vadd.xlane.f32.xlu0 %v3264
    %v3266 = vpop.xlane.xlu0 %3265
    %v3267 = vadd.f32 %v3164, %v3165
    %v3268 = vadd.f32 %v3267, %v3166
    %v3269 = vadd.f32 %v3268, %v3167
    %v3270 = vadd.f32 %v3269, %v3168
    %v3271 = vadd.f32 %v3270, %v3169
    %3272 = vadd.xlane.f32.xlu0 %v3271
    %v3273 = vpop.xlane.xlu0 %3272
    %v3274 = vadd.f32 %v3170, %v3171
    %v3275 = vadd.f32 %v3274, %v3172
    %v3276 = vadd.f32 %v3275, %v3173
    %v3277 = vadd.f32 %v3276, %v3174
    %v3278 = vadd.f32 %v3277, %v3175
    %3279 = vadd.xlane.f32.xlu0 %v3278
    %v3280 = vpop.xlane.xlu0 %3279
    %v3281 = vadd.f32 %v3176, %v3177
    %v3282 = vadd.f32 %v3281, %v3178
    %v3283 = vadd.f32 %v3282, %v3179
    %v3284 = vadd.f32 %v3283, %v3180
    %v3285 = vadd.f32 %v3284, %v3181
    %3286 = vadd.xlane.f32.xlu0 %v3285
    %v3287 = vpop.xlane.xlu0 %3286
    %v3288 = vadd.f32 %v3182, %v3183
    %v3289 = vadd.f32 %v3288, %v3184
    %v3290 = vadd.f32 %v3289, %v3185
    %v3291 = vadd.f32 %v3290, %v3186
    %v3292 = vadd.f32 %v3291, %v3187
    %3293 = vadd.xlane.f32.xlu0 %v3292
    %v3294 = vpop.xlane.xlu0 %3293
    %v3295 = vadd.f32 %v3188, %v3189
    %v3296 = vadd.f32 %v3295, %v3190
    %v3297 = vadd.f32 %v3296, %v3191
    %v3298 = vadd.f32 %v3297, %v3192
    %v3299 = vadd.f32 %v3298, %v3193
    %3300 = vadd.xlane.f32.xlu0 %v3299
    %v3301 = vpop.xlane.xlu0 %3300
    %v3302 = vadd.f32 %v3194, %v3195
    %v3303 = vadd.f32 %v3302, %v3196
    %v3304 = vadd.f32 %v3303, %v3197
    %v3305 = vadd.f32 %v3304, %v3198
    %v3306 = vadd.f32 %v3305, %v3199
    %3307 = vadd.xlane.f32.xlu0 %v3306
    %v3308 = vpop.xlane.xlu0 %3307
    %v3309 = vadd.f32 %v3200, %v3201
    %v3310 = vadd.f32 %v3309, %v3202
    %v3311 = vadd.f32 %v3310, %v3203
    %v3312 = vadd.f32 %v3311, %v3204
    %v3313 = vadd.f32 %v3312, %v3205
    %3314 = vadd.xlane.f32.xlu0 %v3313
    %v3315 = vpop.xlane.xlu0 %3314
    %v3316 = vadd.f32 %v3206, %v3207
    %v3317 = vadd.f32 %v3316, %v3208
    %v3318 = vadd.f32 %v3317, %v3209
    %v3319 = vadd.f32 %v3318, %v3210
    %v3320 = vadd.f32 %v3319, %v3211
    %3321 = vadd.xlane.f32.xlu0 %v3320
    %v3322 = vpop.xlane.xlu0 %3321
    %v3323 = vadd.f32 %v3212, %v3213
    %v3324 = vadd.f32 %v3323, %v3214
    %v3325 = vadd.f32 %v3324, %v3215
    %v3326 = vadd.f32 %v3325, %v3216
    %v3327 = vadd.f32 %v3326, %v3217
    %3328 = vadd.xlane.f32.xlu0 %v3327
    %v3329 = vpop.xlane.xlu0 %3328
    %s3330 = sld [smem:[#allocation2]]
    %v3331 = vstv %s3330
    %v3332 = vadd.f32 %v3224, %v3331
    %v3333 = vadd.f32 %v3231, %v3331
    %v3334 = vadd.f32 %v3238, %v3331
    %v3335 = vadd.f32 %v3245, %v3331
    %v3336 = vadd.f32 %v3252, %v3331
    %v3337 = vadd.f32 %v3259, %v3331
    %v3338 = vadd.f32 %v3266, %v3331
    %v3339 = vadd.f32 %v3273, %v3331
    %v3340 = vadd.f32 %v3280, %v3331
    %v3341 = vadd.f32 %v3287, %v3331
    %v3342 = vadd.f32 %v3294, %v3331
    %v3343 = vadd.f32 %v3301, %v3331
    %v3344 = vadd.f32 %v3308, %v3331
    %v3345 = vadd.f32 %v3315, %v3331
    %v3346 = vadd.f32 %v3322, %v3331
    %v3347 = vadd.f32 %v3329, %v3331
    %v3348 = vxor.u32 %v3332, 2147483648
    %v3349 = vxor.u32 %v3333, 2147483648
    %v3350 = vxor.u32 %v3334, 2147483648
    %v3351 = vxor.u32 %v3335, 2147483648
    %v3352 = vxor.u32 %v3336, 2147483648
    %v3353 = vxor.u32 %v3337, 2147483648
    %v3354 = vxor.u32 %v3338, 2147483648
    %v3355 = vxor.u32 %v3339, 2147483648
    %v3356 = vxor.u32 %v3340, 2147483648
    %v3357 = vxor.u32 %v3341, 2147483648
    %v3358 = vxor.u32 %v3342, 2147483648
    %v3359 = vxor.u32 %v3343, 2147483648
    %v3360 = vxor.u32 %v3344, 2147483648
    %v3361 = vxor.u32 %v3345, 2147483648
    %v3362 = vxor.u32 %v3346, 2147483648
    %v3363 = vxor.u32 %v3347, 2147483648
    %v3364 = vmul.f32 %v3348, 1.442695
    %v3365 = vpow.pop %v3364
    %v3366 = vmul.f32 %v3349, 1.442695
    %v3367 = vpow.pop %v3366
    %v3368 = vmul.f32 %v3350, 1.442695
    %v3369 = vpow.pop %v3368
    %v3370 = vmul.f32 %v3351, 1.442695
    %v3371 = vpow.pop %v3370
    %v3372 = vmul.f32 %v3352, 1.442695
    %v3373 = vpow.pop %v3372
    %v3374 = vmul.f32 %v3353, 1.442695
    %v3375 = vpow.pop %v3374
    %v3376 = vmul.f32 %v3354, 1.442695
    %v3377 = vpow.pop %v3376
    %v3378 = vmul.f32 %v3355, 1.442695
    %v3379 = vpow.pop %v3378
    %v3380 = vmul.f32 %v3356, 1.442695
    %v3381 = vpow.pop %v3380
    %v3382 = vmul.f32 %v3357, 1.442695
    %v3383 = vpow.pop %v3382
    %v3384 = vmul.f32 %v3358, 1.442695
    %v3385 = vpow.pop %v3384
    %v3386 = vmul.f32 %v3359, 1.442695
    %v3387 = vpow.pop %v3386
    %v3388 = vmul.f32 %v3360, 1.442695
    %v3389 = vpow.pop %v3388
    %v3390 = vmul.f32 %v3361, 1.442695
    %v3391 = vpow.pop %v3390
    %v3392 = vmul.f32 %v3362, 1.442695
    %v3393 = vpow.pop %v3392
    %v3394 = vmul.f32 %v3363, 1.442695
    %v3395 = vpow.pop %v3394
    %v3396 = vadd.f32 %v3365, 1.0
    %v3397 = vadd.f32 %v3367, 1.0
    %v3398 = vadd.f32 %v3369, 1.0
    %v3399 = vadd.f32 %v3371, 1.0
    %v3400 = vadd.f32 %v3373, 1.0
    %v3401 = vadd.f32 %v3375, 1.0
    %v3402 = vadd.f32 %v3377, 1.0
    %v3403 = vadd.f32 %v3379, 1.0
    %v3404 = vadd.f32 %v3381, 1.0
    %v3405 = vadd.f32 %v3383, 1.0
    %v3406 = vadd.f32 %v3385, 1.0
    %v3407 = vadd.f32 %v3387, 1.0
    %v3408 = vadd.f32 %v3389, 1.0
    %v3409 = vadd.f32 %v3391, 1.0
    %v3410 = vadd.f32 %v3393, 1.0
    %v3411 = vadd.f32 %v3395, 1.0
    %v3412 = vrcp.pop %v3396
    %v3413 = vmul.f32 1.0, %v3412
    %v3414 = vrcp.pop %v3397
    %v3415 = vmul.f32 1.0, %v3414
    %v3416 = vrcp.pop %v3398
    %v3417 = vmul.f32 1.0, %v3416
    %v3418 = vrcp.pop %v3399
    %v3419 = vmul.f32 1.0, %v3418
    %v3420 = vrcp.pop %v3400
    %v3421 = vmul.f32 1.0, %v3420
    %v3422 = vrcp.pop %v3401
    %v3423 = vmul.f32 1.0, %v3422
    %v3424 = vrcp.pop %v3402
    %v3425 = vmul.f32 1.0, %v3424
    %v3426 = vrcp.pop %v3403
    %v3427 = vmul.f32 1.0, %v3426
    %v3428 = vrcp.pop %v3404
    %v3429 = vmul.f32 1.0, %v3428
    %v3430 = vrcp.pop %v3405
    %v3431 = vmul.f32 1.0, %v3430
    %v3432 = vrcp.pop %v3406
    %v3433 = vmul.f32 1.0, %v3432
    %v3434 = vrcp.pop %v3407
    %v3435 = vmul.f32 1.0, %v3434
    %v3436 = vrcp.pop %v3408
    %v3437 = vmul.f32 1.0, %v3436
    %v3438 = vrcp.pop %v3409
    %v3439 = vmul.f32 1.0, %v3438
    %v3440 = vrcp.pop %v3410
    %v3441 = vmul.f32 1.0, %v3440
    %v3442 = vrcp.pop %v3411
    %v3443 = vmul.f32 1.0, %v3442
    %3444 = vxpose.xlu0.b32.start [1/16] %v3413, 128
    %3445 = vxpose.xlu0.b32.cont [2/16] %v3415, 128
    %3446 = vxpose.xlu0.b32.cont [3/16] %v3417, 128
    %3447 = vxpose.xlu0.b32.cont [4/16] %v3419, 128
    %3448 = vxpose.xlu0.b32.cont [5/16] %v3421, 128
    %3449 = vxpose.xlu0.b32.cont [6/16] %v3423, 128
    %3450 = vxpose.xlu0.b32.cont [7/16] %v3425, 128
    %3451 = vxpose.xlu0.b32.cont [8/16] %v3427, 128
    %3452 = vxpose.xlu0.b32.cont [9/16] %v3429, 128
    %3453 = vxpose.xlu0.b32.cont [10/16] %v3431, 128
    %3454 = vxpose.xlu0.b32.cont [11/16] %v3433, 128
    %3455 = vxpose.xlu0.b32.cont [12/16] %v3435, 128
    %3456 = vxpose.xlu0.b32.cont [13/16] %v3437, 128
    %3457 = vxpose.xlu0.b32.cont [14/16] %v3439, 128
    %3458 = vxpose.xlu0.b32.cont [15/16] %v3441, 128
    %3459 = vxpose.xlu0.b32.end [16/16] %v3443, 128
    %v3460 = vpop.trf.xlu0
    %v3461 = vpop.trf.xlu0
    %v3462 = vpop.trf.xlu0
    %v3463 = vpop.trf.xlu0
    %v3464 = vpop.trf.xlu0
    %v3465 = vpop.trf.xlu0
    %v3466 = vpop.trf.xlu0
    %v3467 = vpop.trf.xlu0
    %v3468 = vpop.trf.xlu0
    %v3469 = vpop.trf.xlu0
    %v3470 = vpop.trf.xlu0
    %v3471 = vpop.trf.xlu0
    %v3472 = vpop.trf.xlu0
    %v3473 = vpop.trf.xlu0
    %v3474 = vpop.trf.xlu0
    %v3475 = vpop.trf.xlu0
    %3476 = vst [vmem:[#allocation11] sm:$0x1] %v3460
    // Predicated region
    $region38: #{tpu_custom_call.1} parent=1 // pred_check
      _
    $region39: #{tpu_custom_call.1} parent=1 // pred_check_branch
      %3478 = sbr.rel (0) target = $region41
    $region40: #{tpu_custom_call.1} parent=1 // pred_region
      %s3480 = ssub.s32 16, 16
      %3481 = vsyncadd [#allocation5], %s3480
      %s3483 = sshll.u32 [#allocation11], 4
      %s3484 = int_to_ptr.vmem [resolvable:$true] %s3483
      %3486 = dma.vmem_to_hbm [thread:$0]  %s3484, 16, %s5, [#allocation5]
    $region41: #{tpu_custom_call.1} parent=1 // pred_fallthru
      _
    // Predicated region
    $region42: #{tpu_custom_call.1} parent=1 // pred_check
      _
    $region43: #{tpu_custom_call.1} parent=1 // pred_check_branch
      %3488 = sbr.rel (0) target = $region45
    $region44: #{tpu_custom_call.1} parent=1 // pred_region
      %3489 = dma.done [#allocation5], 16
    $region45: #{tpu_custom_call.1} parent=1 // pred_fallthru
      _
    %3490 = vsyncpa [#allocation4], 1
    %3491 = vsyncpa [#allocation7], 1
    %3492 = vsyncpa [#allocation10], 1
    %3493 = vsyncpa [#allocation5], 1

</llo_original>
